<compile_context>
chip_gen: v5e
topology: v5e:2x2
jax: 0.10.0
libtpu: 0.0.40
codegen_flags: <defaults>
</compile_context>

<pallas_src>
import functools

import jax
import jax.numpy as jnp
import numpy as np
from jax import lax
from jax.experimental import pallas as pl
from jax.experimental.pallas import tpu as pltpu


# ----------------------------- tiny dictionary ------------------------------
class TinyDictionary:
    def __init__(self, vocab_size):
        # index 0 = <pad>, index 1 = <eos>, rest are dummy words
        self.idx2word = ["<pad>", "<eos>"] + [f"w{i}" for i in range(vocab_size - 2)]
        self.word2idx = {w: i for i, w in enumerate(self.idx2word)}

    def __len__(self):
        return len(self.idx2word)


# ------------------------------- Pallas kernel ------------------------------
def decoder_kernel(cap_ref,                     # scalar-prefetch SMEM: (T,) int32 captions
                   img_ref,                     # (1, E)    image embedding (initial h, c)
                   emb_ref,                     # (V, E)    embedding table
                   wih_ref,                     # (E, 4E)   W_ih^T
                   whh_ref,                     # (E, 4E)   W_hh^T
                   b_ref,                       # (1, 4E)   b_ih + b_hh
                   wout_ref,                    # (E, Vp)   W_out^T, vocab padded to 128 lanes
                   bout_ref,                    # (1, Vp)   b_out, padded
                   pad_ref,                     # (1, Vp)   precomputed one-hot(<pad>) row
                   out_ref,                     # (T, Vp)   full output tile
                   h_ref, c_ref,                # scratch: (1, E) VMEM x2
                   xs_ref,                      # scratch: (T, E)  gathered embeddings
                   xw_ref,                      # scratch: (T, 4E) X @ W_ih^T + bias
                   hs_ref,                      # scratch: (T, E)  per-step hidden states
                   *, emb_size, vocab_size, eos_idx, max_len):
    E = emb_size

    # initial hidden / cell state = image embedding
    h_ref[...] = img_ref[...]
    c_ref[...] = img_ref[...]
    # zero the h history so post-<eos> (never-written) rows hold finite values
    hs_ref[...] = jnp.zeros_like(hs_ref)

    # ---------------- hoisted input projection (off the critical path) ------
    # Gather all caption embeddings (8 dynamic row loads), then one M=T MXU
    # push computes the input-side gate contribution for every step at once.
    for t in range(max_len):
        w = cap_ref[t]
        w = jnp.minimum(jnp.maximum(w, 0), vocab_size - 1)   # clamp (unchecked VMEM gather)
        xs_ref[pl.ds(t, 1), :] = emb_ref[pl.ds(w, 1), :]
    xw_ref[...] = (jnp.dot(xs_ref[...], wih_ref[...],
                           preferred_element_type=jnp.float32)
                   + b_ref[...])                                       # (T, 4E)

    # ---------------- serialized recurrence ---------------------------------
    def step(t, eos_pos):
        word = cap_ref[t]
        # first-<eos> position; updated BEFORE the gated body so the <eos>
        # row itself stays pad (matches reference ordering).
        eos_pos = jnp.minimum(eos_pos, jnp.where(word == eos_idx, t, max_len))

        @pl.when(t < eos_pos)
        def _():
            # gates = precomputed (x@W_ih^T + b) + h@W_hh^T  -> single MXU push
            gates = (xw_ref[pl.ds(t, 1), :]
                     + jnp.dot(h_ref[...], whh_ref[...],
                               preferred_element_type=jnp.float32))    # (1, 4E)
            i_g = jax.nn.sigmoid(gates[:, 0 * E:1 * E])
            f_g = jax.nn.sigmoid(gates[:, 1 * E:2 * E])
            g_g = jnp.tanh(gates[:, 2 * E:3 * E])
            o_g = jax.nn.sigmoid(gates[:, 3 * E:4 * E])
            c_new = f_g * c_ref[...] + i_g * g_g
            h_new = o_g * jnp.tanh(c_new)
            c_ref[...] = c_new
            h_ref[...] = h_new
            hs_ref[pl.ds(t, 1), :] = h_new

        return eos_pos

    eos_pos = lax.fori_loop(0, max_len, step, jnp.int32(max_len), unroll=True)

    # ---------------- batched output head (one matmul, one dense store) -----
    logits = (jnp.dot(hs_ref[...], wout_ref[...],
                      preferred_element_type=jnp.float32)
              + bout_ref[...])                                         # (T, Vp)
    logits = jnp.maximum(logits, 0.0)
    row_ids = lax.broadcasted_iota(jnp.int32, (max_len, out_ref.shape[1]), 0)
    pad_mask = row_ids >= eos_pos                                      # rows at/after <eos>
    pad_full = jnp.broadcast_to(pad_ref[...], out_ref.shape)
    out_ref[...] = jnp.where(pad_mask, pad_full, logits)


def decoder_forward(captions, image_emb, params, *, eos_idx, max_len, vocab_size):
    """captions: (max_len,) int32; image_emb: (1, E) f32 -> (max_len, V) f32."""
    emb_t, wih_t, whh_t, b_fused, wout_p, bout_p, pad_row = params
    V, E = emb_t.shape
    Vp = wout_p.shape[1]

    kernel = functools.partial(decoder_kernel, emb_size=E, vocab_size=V,
                               eos_idx=eos_idx, max_len=max_len)

    grid_spec = pltpu.PrefetchScalarGridSpec(
        num_scalar_prefetch=1,
        grid=(1,),                                             # single invocation
        in_specs=[
            pl.BlockSpec((1, E), lambda i, cap: (0, 0)),           # image_emb
            pl.BlockSpec((V, E), lambda i, cap: (0, 0)),           # embedding table
            pl.BlockSpec((E, 4 * E), lambda i, cap: (0, 0)),       # W_ih^T
            pl.BlockSpec((E, 4 * E), lambda i, cap: (0, 0)),       # W_hh^T
            pl.BlockSpec((1, 4 * E), lambda i, cap: (0, 0)),       # b_ih + b_hh
            pl.BlockSpec((E, Vp), lambda i, cap: (0, 0)),          # W_out^T (padded)
            pl.BlockSpec((1, Vp), lambda i, cap: (0, 0)),          # b_out (padded)
            pl.BlockSpec((1, Vp), lambda i, cap: (0, 0)),          # <pad> one-hot row
        ],
        out_specs=pl.BlockSpec((max_len, Vp), lambda i, cap: (0, 0)),
        scratch_shapes=[
            pltpu.VMEM((1, E), jnp.float32),           # h
            pltpu.VMEM((1, E), jnp.float32),           # c
            pltpu.VMEM((max_len, E), jnp.float32),     # gathered embeddings X
            pltpu.VMEM((max_len, 4 * E), jnp.float32), # X @ W_ih^T + b
            pltpu.VMEM((max_len, E), jnp.float32),     # hidden-state history
        ],
    )

    out_padded = pl.pallas_call(
        kernel,
        out_shape=jax.ShapeDtypeStruct((max_len, Vp), jnp.float32),
        grid_spec=grid_spec,
        compiler_params=pltpu.CompilerParams(
            dimension_semantics=("arbitrary",)),
    )(captions, image_emb, emb_t, wih_t, whh_t, b_fused, wout_p, bout_p, pad_row)

    return out_padded[:, :vocab_size]


# -------------------------- pure-numpy reference (host) ---------------------
def reference_forward(captions, image_emb, raw_params, *, eos_idx, pad_idx,
                      max_len, vocab_size):
    emb_table, w_ih, w_hh, b_ih, b_hh, w_out, b_out = raw_params
    E = emb_table.shape[1]
    h = np.array(image_emb[0])
    c = np.array(image_emb[0])
    out = []
    for w in np.array(captions).tolist():
        if w != eos_idx:
            x = np.array(emb_table[w])
            gates = x @ np.array(w_ih).T + np.array(b_ih) \
                + h @ np.array(w_hh).T + np.array(b_hh)
            i_g = 1.0 / (1.0 + np.exp(-gates[0 * E:1 * E]))
            f_g = 1.0 / (1.0 + np.exp(-gates[1 * E:2 * E]))
            g_g = np.tanh(gates[2 * E:3 * E])
            o_g = 1.0 / (1.0 + np.exp(-gates[3 * E:4 * E]))
            c = f_g * c + i_g * g_g
            h = o_g * np.tanh(c)
            out.append(np.maximum(h @ np.array(w_out).T + np.array(b_out), 0.0))
        else:
            while len(out) < max_len:
                pad = np.zeros((vocab_size,), np.float32)
                pad[pad_idx] = 1.0
                out.append(pad)
            break
    return np.stack(out, axis=0)


# ----------------------------------- main ------------------------------------
if __name__ == "__main__":
    VOCAB = 16
    EMB = 32
    MAX_LEN = 8
    LANE = 128
    VP = ((VOCAB + LANE - 1) // LANE) * LANE     # vocab padded to a 128-lane tile

    dictionary = TinyDictionary(VOCAB)
    pad_idx = dictionary.word2idx["<pad>"]
    eos_idx = dictionary.word2idx["<eos>"]

    key = jax.random.PRNGKey(0)
    k = jax.random.split(key, 8)
    emb_table = jax.random.normal(k[0], (VOCAB, EMB), jnp.float32) * 0.1
    w_ih = jax.random.normal(k[1], (4 * EMB, EMB), jnp.float32) * 0.1
    w_hh = jax.random.normal(k[2], (4 * EMB, EMB), jnp.float32) * 0.1
    b_ih = jax.random.normal(k[3], (4 * EMB,), jnp.float32) * 0.1
    b_hh = jax.random.normal(k[4], (4 * EMB,), jnp.float32) * 0.1
    w_out = jax.random.normal(k[5], (VOCAB, EMB), jnp.float32) * 0.1
    b_out = jax.random.normal(k[6], (VOCAB,), jnp.float32) * 0.1
    image_emb = jax.random.normal(k[7], (1, EMB), jnp.float32)

    # captions: 5 real words, then <eos>, then ignored trailing tokens
    captions = jnp.array([3, 7, 4, 9, 2, eos_idx, 5, 6], dtype=jnp.int32)

    # host-side glue: transpose weights, fuse biases, pad output head to 128
    # lanes, precompute the <pad> one-hot row
    wih_t = w_ih.T                                                         # (E, 4E)
    whh_t = w_hh.T                                                         # (E, 4E)
    b_fused = (b_ih + b_hh)[None, :]                                       # (1, 4E)
    wout_p = jnp.zeros((EMB, VP), jnp.float32).at[:, :VOCAB].set(w_out.T)  # (E, Vp)
    bout_p = jnp.zeros((1, VP), jnp.float32).at[:, :VOCAB].set(b_out[None, :])
    pad_row = jnp.zeros((1, VP), jnp.float32).at[0, pad_idx].set(1.0)

    kernel_params = (emb_table, wih_t, whh_t, b_fused, wout_p, bout_p, pad_row)

    out = decoder_forward(captions, image_emb, kernel_params,
                          eos_idx=eos_idx, max_len=MAX_LEN, vocab_size=VOCAB)
    out = jax.block_until_ready(out)

    ref = reference_forward(captions, image_emb,
                            (emb_table, w_ih, w_hh, b_ih, b_hh, w_out, b_out),
                            eos_idx=eos_idx, pad_idx=pad_idx,
                            max_len=MAX_LEN, vocab_size=VOCAB)

    np.testing.assert_allclose(np.array(out), ref, rtol=1e-3, atol=1e-3)
    print("KERNEL_OK")
</pallas_src>

<mosaic_0001>
module attributes {stable_mosaic.version = 11 : i64} {
  func.func @decoder_kernel(%arg0: i32, %arg1: memref<8xi32, #tpu.memory_space<smem>>, %arg2: memref<1x32xf32, #tpu.memory_space<vmem>>, %arg3: memref<16x32xf32, #tpu.memory_space<vmem>>, %arg4: memref<32x128xf32, #tpu.memory_space<vmem>>, %arg5: memref<32x128xf32, #tpu.memory_space<vmem>>, %arg6: memref<1x128xf32, #tpu.memory_space<vmem>>, %arg7: memref<32x128xf32, #tpu.memory_space<vmem>>, %arg8: memref<1x128xf32, #tpu.memory_space<vmem>>, %arg9: memref<1x128xf32, #tpu.memory_space<vmem>>, %arg10: memref<8x128xf32, #tpu.memory_space<vmem>>, %arg11: memref<1x32xf32, #tpu.memory_space<vmem>>, %arg12: memref<1x32xf32, #tpu.memory_space<vmem>>, %arg13: memref<8x32xf32, #tpu.memory_space<vmem>>, %arg14: memref<8x128xf32, #tpu.memory_space<vmem>>, %arg15: memref<8x32xf32, #tpu.memory_space<vmem>>) attributes {dimension_semantics = [#tpu.dimension_semantics<arbitrary>], iteration_bounds = array<i64: 1>, scalar_prefetch = 1 : i64, scratch_operands = 5 : i64, tpu.core_type = #tpu.core_type<tc>, window_params = [{pipeline_mode = #tpu.pipeline_mode<synchronous>, transform_indices = @transform_0, window_bounds = array<i64: 1, 32>}, {pipeline_mode = #tpu.pipeline_mode<synchronous>, transform_indices = @transform_1, window_bounds = array<i64: 16, 32>}, {pipeline_mode = #tpu.pipeline_mode<synchronous>, transform_indices = @transform_2, window_bounds = array<i64: 32, 128>}, {pipeline_mode = #tpu.pipeline_mode<synchronous>, transform_indices = @transform_3, window_bounds = array<i64: 32, 128>}, {pipeline_mode = #tpu.pipeline_mode<synchronous>, transform_indices = @transform_4, window_bounds = array<i64: 1, 128>}, {pipeline_mode = #tpu.pipeline_mode<synchronous>, transform_indices = @transform_5, window_bounds = array<i64: 32, 128>}, {pipeline_mode = #tpu.pipeline_mode<synchronous>, transform_indices = @transform_6, window_bounds = array<i64: 1, 128>}, {pipeline_mode = #tpu.pipeline_mode<synchronous>, transform_indices = @transform_7, window_bounds = array<i64: 1, 128>}, {pipeline_mode = #tpu.pipeline_mode<synchronous>, transform_indices = @transform_8, window_bounds = array<i64: 8, 128>}]} {
    %c0 = arith.constant 0 : index
    %c0_0 = arith.constant 0 : index
    %0 = vector.load %arg2[%c0, %c0_0] : memref<1x32xf32, #tpu.memory_space<vmem>>, vector<1x32xf32>
    %c0_1 = arith.constant 0 : index
    %c0_2 = arith.constant 0 : index
    %1 = vector.load %arg11[%c0_1, %c0_2] : memref<1x32xf32, #tpu.memory_space<vmem>>, vector<1x32xf32>
    tpu.vector_store %arg11[%c0_1, %c0_2], %0 {strides = array<i32>} : memref<1x32xf32, #tpu.memory_space<vmem>>, vector<1x32xf32>,
    %c0_3 = arith.constant 0 : index
    %c0_4 = arith.constant 0 : index
    %2 = vector.load %arg2[%c0_3, %c0_4] : memref<1x32xf32, #tpu.memory_space<vmem>>, vector<1x32xf32>
    %c0_5 = arith.constant 0 : index
    %c0_6 = arith.constant 0 : index
    %3 = vector.load %arg12[%c0_5, %c0_6] : memref<1x32xf32, #tpu.memory_space<vmem>>, vector<1x32xf32>
    tpu.vector_store %arg12[%c0_5, %c0_6], %2 {strides = array<i32>} : memref<1x32xf32, #tpu.memory_space<vmem>>, vector<1x32xf32>,
    %cst = arith.constant 0.000000e+00 : f32
    %4 = vector.broadcast %cst : f32 to vector<8x32xf32>
    %c0_7 = arith.constant 0 : index
    %c0_8 = arith.constant 0 : index
    %5 = vector.load %arg15[%c0_7, %c0_8] : memref<8x32xf32, #tpu.memory_space<vmem>>, vector<8x32xf32>
    tpu.vector_store %arg15[%c0_7, %c0_8], %4 {strides = array<i32>} : memref<8x32xf32, #tpu.memory_space<vmem>>, vector<8x32xf32>,
    %c0_9 = arith.constant 0 : index
    %6 = memref.load %arg1[%c0_9] : memref<8xi32, #tpu.memory_space<smem>>
    %c0_i32 = arith.constant 0 : i32
    %7 = arith.maxsi %6, %c0_i32 : i32
    %c15_i32 = arith.constant 15 : i32
    %8 = arith.minsi %7, %c15_i32 : i32
    %9 = arith.index_cast %8 : i32 to index
    %c0_10 = arith.constant 0 : index
    %10 = vector.load %arg3[%9, %c0_10] : memref<16x32xf32, #tpu.memory_space<vmem>>, vector<1x32xf32>
    %c0_11 = arith.constant 0 : index
    %c0_12 = arith.constant 0 : index
    %11 = vector.load %arg13[%c0_11, %c0_12] : memref<8x32xf32, #tpu.memory_space<vmem>>, vector<1x32xf32>
    tpu.vector_store %arg13[%c0_11, %c0_12], %10 {strides = array<i32>} : memref<8x32xf32, #tpu.memory_space<vmem>>, vector<1x32xf32>,
    %c1 = arith.constant 1 : index
    %12 = memref.load %arg1[%c1] : memref<8xi32, #tpu.memory_space<smem>>
    %c0_i32_13 = arith.constant 0 : i32
    %13 = arith.maxsi %12, %c0_i32_13 : i32
    %c15_i32_14 = arith.constant 15 : i32
    %14 = arith.minsi %13, %c15_i32_14 : i32
    %15 = arith.index_cast %14 : i32 to index
    %c0_15 = arith.constant 0 : index
    %16 = vector.load %arg3[%15, %c0_15] : memref<16x32xf32, #tpu.memory_space<vmem>>, vector<1x32xf32>
    %c1_16 = arith.constant 1 : index
    %c0_17 = arith.constant 0 : index
    %17 = vector.load %arg13[%c1_16, %c0_17] : memref<8x32xf32, #tpu.memory_space<vmem>>, vector<1x32xf32>
    tpu.vector_store %arg13[%c1_16, %c0_17], %16 {strides = array<i32>} : memref<8x32xf32, #tpu.memory_space<vmem>>, vector<1x32xf32>,
    %c2 = arith.constant 2 : index
    %18 = memref.load %arg1[%c2] : memref<8xi32, #tpu.memory_space<smem>>
    %c0_i32_18 = arith.constant 0 : i32
    %19 = arith.maxsi %18, %c0_i32_18 : i32
    %c15_i32_19 = arith.constant 15 : i32
    %20 = arith.minsi %19, %c15_i32_19 : i32
    %21 = arith.index_cast %20 : i32 to index
    %c0_20 = arith.constant 0 : index
    %22 = vector.load %arg3[%21, %c0_20] : memref<16x32xf32, #tpu.memory_space<vmem>>, vector<1x32xf32>
    %c2_21 = arith.constant 2 : index
    %c0_22 = arith.constant 0 : index
    %23 = vector.load %arg13[%c2_21, %c0_22] : memref<8x32xf32, #tpu.memory_space<vmem>>, vector<1x32xf32>
    tpu.vector_store %arg13[%c2_21, %c0_22], %22 {strides = array<i32>} : memref<8x32xf32, #tpu.memory_space<vmem>>, vector<1x32xf32>,
    %c3 = arith.constant 3 : index
    %24 = memref.load %arg1[%c3] : memref<8xi32, #tpu.memory_space<smem>>
    %c0_i32_23 = arith.constant 0 : i32
    %25 = arith.maxsi %24, %c0_i32_23 : i32
    %c15_i32_24 = arith.constant 15 : i32
    %26 = arith.minsi %25, %c15_i32_24 : i32
    %27 = arith.index_cast %26 : i32 to index
    %c0_25 = arith.constant 0 : index
    %28 = vector.load %arg3[%27, %c0_25] : memref<16x32xf32, #tpu.memory_space<vmem>>, vector<1x32xf32>
    %c3_26 = arith.constant 3 : index
    %c0_27 = arith.constant 0 : index
    %29 = vector.load %arg13[%c3_26, %c0_27] : memref<8x32xf32, #tpu.memory_space<vmem>>, vector<1x32xf32>
    tpu.vector_store %arg13[%c3_26, %c0_27], %28 {strides = array<i32>} : memref<8x32xf32, #tpu.memory_space<vmem>>, vector<1x32xf32>,
    %c4 = arith.constant 4 : index
    %30 = memref.load %arg1[%c4] : memref<8xi32, #tpu.memory_space<smem>>
    %c0_i32_28 = arith.constant 0 : i32
    %31 = arith.maxsi %30, %c0_i32_28 : i32
    %c15_i32_29 = arith.constant 15 : i32
    %32 = arith.minsi %31, %c15_i32_29 : i32
    %33 = arith.index_cast %32 : i32 to index
    %c0_30 = arith.constant 0 : index
    %34 = vector.load %arg3[%33, %c0_30] : memref<16x32xf32, #tpu.memory_space<vmem>>, vector<1x32xf32>
    %c4_31 = arith.constant 4 : index
    %c0_32 = arith.constant 0 : index
    %35 = vector.load %arg13[%c4_31, %c0_32] : memref<8x32xf32, #tpu.memory_space<vmem>>, vector<1x32xf32>
    tpu.vector_store %arg13[%c4_31, %c0_32], %34 {strides = array<i32>} : memref<8x32xf32, #tpu.memory_space<vmem>>, vector<1x32xf32>,
    %c5 = arith.constant 5 : index
    %36 = memref.load %arg1[%c5] : memref<8xi32, #tpu.memory_space<smem>>
    %c0_i32_33 = arith.constant 0 : i32
    %37 = arith.maxsi %36, %c0_i32_33 : i32
    %c15_i32_34 = arith.constant 15 : i32
    %38 = arith.minsi %37, %c15_i32_34 : i32
    %39 = arith.index_cast %38 : i32 to index
    %c0_35 = arith.constant 0 : index
    %40 = vector.load %arg3[%39, %c0_35] : memref<16x32xf32, #tpu.memory_space<vmem>>, vector<1x32xf32>
    %c5_36 = arith.constant 5 : index
    %c0_37 = arith.constant 0 : index
    %41 = vector.load %arg13[%c5_36, %c0_37] : memref<8x32xf32, #tpu.memory_space<vmem>>, vector<1x32xf32>
    tpu.vector_store %arg13[%c5_36, %c0_37], %40 {strides = array<i32>} : memref<8x32xf32, #tpu.memory_space<vmem>>, vector<1x32xf32>,
    %c6 = arith.constant 6 : index
    %42 = memref.load %arg1[%c6] : memref<8xi32, #tpu.memory_space<smem>>
    %c0_i32_38 = arith.constant 0 : i32
    %43 = arith.maxsi %42, %c0_i32_38 : i32
    %c15_i32_39 = arith.constant 15 : i32
    %44 = arith.minsi %43, %c15_i32_39 : i32
    %45 = arith.index_cast %44 : i32 to index
    %c0_40 = arith.constant 0 : index
    %46 = vector.load %arg3[%45, %c0_40] : memref<16x32xf32, #tpu.memory_space<vmem>>, vector<1x32xf32>
    %c6_41 = arith.constant 6 : index
    %c0_42 = arith.constant 0 : index
    %47 = vector.load %arg13[%c6_41, %c0_42] : memref<8x32xf32, #tpu.memory_space<vmem>>, vector<1x32xf32>
    tpu.vector_store %arg13[%c6_41, %c0_42], %46 {strides = array<i32>} : memref<8x32xf32, #tpu.memory_space<vmem>>, vector<1x32xf32>,
    %c7 = arith.constant 7 : index
    %48 = memref.load %arg1[%c7] : memref<8xi32, #tpu.memory_space<smem>>
    %c0_i32_43 = arith.constant 0 : i32
    %49 = arith.maxsi %48, %c0_i32_43 : i32
    %c15_i32_44 = arith.constant 15 : i32
    %50 = arith.minsi %49, %c15_i32_44 : i32
    %51 = arith.index_cast %50 : i32 to index
    %c0_45 = arith.constant 0 : index
    %52 = vector.load %arg3[%51, %c0_45] : memref<16x32xf32, #tpu.memory_space<vmem>>, vector<1x32xf32>
    %c7_46 = arith.constant 7 : index
    %c0_47 = arith.constant 0 : index
    %53 = vector.load %arg13[%c7_46, %c0_47] : memref<8x32xf32, #tpu.memory_space<vmem>>, vector<1x32xf32>
    tpu.vector_store %arg13[%c7_46, %c0_47], %52 {strides = array<i32>} : memref<8x32xf32, #tpu.memory_space<vmem>>, vector<1x32xf32>,
    %c0_48 = arith.constant 0 : index
    %c0_49 = arith.constant 0 : index
    %54 = vector.load %arg13[%c0_48, %c0_49] : memref<8x32xf32, #tpu.memory_space<vmem>>, vector<8x32xf32>
    %c0_50 = arith.constant 0 : index
    %c0_51 = arith.constant 0 : index
    %55 = vector.load %arg4[%c0_50, %c0_51] : memref<32x128xf32, #tpu.memory_space<vmem>>, vector<32x128xf32>
    %cst_52 = arith.constant dense<0.000000e+00> : vector<8x128xf32>
    %56 = tpu.matmul %54, %55, %cst_52 {dimension_numbers = #tpu.dot_dimension_numbers<[1], [0], [0], [1], [0, 0, 1, 1], [], []>} : vector<8x32xf32>, vector<32x128xf32>, vector<8x128xf32> -> vector<8x128xf32>
    %c0_53 = arith.constant 0 : index
    %c0_54 = arith.constant 0 : index
    %57 = vector.load %arg6[%c0_53, %c0_54] : memref<1x128xf32, #tpu.memory_space<vmem>>, vector<1x128xf32>
    %58 = vector.broadcast %57 : vector<1x128xf32> to vector<8x128xf32>
    %59 = arith.addf %56, %58 : vector<8x128xf32>
    %c0_55 = arith.constant 0 : index
    %c0_56 = arith.constant 0 : index
    %60 = vector.load %arg14[%c0_55, %c0_56] : memref<8x128xf32, #tpu.memory_space<vmem>>, vector<8x128xf32>
    tpu.vector_store %arg14[%c0_55, %c0_56], %59 {strides = array<i32>} : memref<8x128xf32, #tpu.memory_space<vmem>>, vector<8x128xf32>,
    %c8_i32 = arith.constant 8 : i32
    %c0_i32_57 = arith.constant 0 : i32
    %61 = arith.index_cast %c0_i32_57 : i32 to index
    %62 = memref.load %arg1[%61] : memref<8xi32, #tpu.memory_space<smem>>
    %c1_i32 = arith.constant 1 : i32
    %63 = arith.cmpi eq, %62, %c1_i32 : i32
    %c8_i32_58 = arith.constant 8 : i32
    %64 = arith.select %63, %c0_i32_57, %c8_i32_58 : i32
    %65 = arith.minsi %c8_i32, %64 : i32
    %66 = arith.cmpi slt, %c0_i32_57, %65 : i32
    %67 = arith.extui %66 : i1 to i32
    %c0_i32_59 = arith.constant 0 : i32
    %68 = arith.cmpi ne, %67, %c0_i32_59 : i32
    scf.if %68 {
      %141 = arith.index_cast %c0_i32_57 : i32 to index
      %c0_95 = arith.constant 0 : index
      %142 = vector.load %arg14[%141, %c0_95] : memref<8x128xf32, #tpu.memory_space<vmem>>, vector<1x128xf32>
      %c0_96 = arith.constant 0 : index
      %c0_97 = arith.constant 0 : index
      %143 = vector.load %arg11[%c0_96, %c0_97] : memref<1x32xf32, #tpu.memory_space<vmem>>, vector<1x32xf32>
      %c0_98 = arith.constant 0 : index
      %c0_99 = arith.constant 0 : index
      %144 = vector.load %arg5[%c0_98, %c0_99] : memref<32x128xf32, #tpu.memory_space<vmem>>, vector<32x128xf32>
      %cst_100 = arith.constant dense<0.000000e+00> : vector<1x128xf32>
      %145 = tpu.matmul %143, %144, %cst_100 {dimension_numbers = #tpu.dot_dimension_numbers<[1], [0], [0], [1], [0, 0, 1, 1], [], []>} : vector<1x32xf32>, vector<32x128xf32>, vector<1x128xf32> -> vector<1x128xf32>
      %146 = arith.addf %142, %145 : vector<1x128xf32>
      %147 = vector.extract_strided_slice %146 {offsets = [0, 0], sizes = [1, 32], strides = [1, 1]} : vector<1x128xf32> to vector<1x32xf32>
      %148 = arith.negf %147 : vector<1x32xf32>
      %149 = math.exp %148 : vector<1x32xf32>
      %cst_101 = arith.constant 1.000000e+00 : f32
      %150 = vector.broadcast %cst_101 : f32 to vector<1x32xf32>
      %151 = arith.addf %150, %149 : vector<1x32xf32>
      %152 = arith.divf %150, %151 : vector<1x32xf32>
      %153 = vector.extract_strided_slice %146 {offsets = [0, 32], sizes = [1, 32], strides = [1, 1]} : vector<1x128xf32> to vector<1x32xf32>
      %154 = arith.negf %153 : vector<1x32xf32>
      %155 = math.exp %154 : vector<1x32xf32>
      %cst_102 = arith.constant 1.000000e+00 : f32
      %156 = vector.broadcast %cst_102 : f32 to vector<1x32xf32>
      %157 = arith.addf %156, %155 : vector<1x32xf32>
      %158 = arith.divf %156, %157 : vector<1x32xf32>
      %159 = vector.extract_strided_slice %146 {offsets = [0, 64], sizes = [1, 32], strides = [1, 1]} : vector<1x128xf32> to vector<1x32xf32>
      %160 = math.tanh %159 : vector<1x32xf32>
      %161 = vector.extract_strided_slice %146 {offsets = [0, 96], sizes = [1, 32], strides = [1, 1]} : vector<1x128xf32> to vector<1x32xf32>
      %162 = arith.negf %161 : vector<1x32xf32>
      %163 = math.exp %162 : vector<1x32xf32>
      %cst_103 = arith.constant 1.000000e+00 : f32
      %164 = vector.broadcast %cst_103 : f32 to vector<1x32xf32>
      %165 = arith.addf %164, %163 : vector<1x32xf32>
      %166 = arith.divf %164, %165 : vector<1x32xf32>
      %c0_104 = arith.constant 0 : index
      %c0_105 = arith.constant 0 : index
      %167 = vector.load %arg12[%c0_104, %c0_105] : memref<1x32xf32, #tpu.memory_space<vmem>>, vector<1x32xf32>
      %168 = arith.mulf %158, %167 : vector<1x32xf32>
      %169 = arith.mulf %152, %160 : vector<1x32xf32>
      %170 = arith.addf %168, %169 : vector<1x32xf32>
      %171 = math.tanh %170 : vector<1x32xf32>
      %172 = arith.mulf %166, %171 : vector<1x32xf32>
      %c0_106 = arith.constant 0 : index
      %c0_107 = arith.constant 0 : index
      %173 = vector.load %arg12[%c0_106, %c0_107] : memref<1x32xf32, #tpu.memory_space<vmem>>, vector<1x32xf32>
      tpu.vector_store %arg12[%c0_106, %c0_107], %170 {strides = array<i32>} : memref<1x32xf32, #tpu.memory_space<vmem>>, vector<1x32xf32>,
      %c0_108 = arith.constant 0 : index
      %c0_109 = arith.constant 0 : index
      %174 = vector.load %arg11[%c0_108, %c0_109] : memref<1x32xf32, #tpu.memory_space<vmem>>, vector<1x32xf32>
      tpu.vector_store %arg11[%c0_108, %c0_109], %172 {strides = array<i32>} : memref<1x32xf32, #tpu.memory_space<vmem>>, vector<1x32xf32>,
      %175 = arith.index_cast %c0_i32_57 : i32 to index
      %c0_110 = arith.constant 0 : index
      %176 = vector.load %arg15[%175, %c0_110] : memref<8x32xf32, #tpu.memory_space<vmem>>, vector<1x32xf32>
      tpu.vector_store %arg15[%175, %c0_110], %172 {strides = array<i32>} : memref<8x32xf32, #tpu.memory_space<vmem>>, vector<1x32xf32>,
    } else {
    }
    %c1_i32_60 = arith.constant 1 : i32
    %69 = arith.index_cast %c1_i32_60 : i32 to index
    %70 = memref.load %arg1[%69] : memref<8xi32, #tpu.memory_space<smem>>
    %c1_i32_61 = arith.constant 1 : i32
    %71 = arith.cmpi eq, %70, %c1_i32_61 : i32
    %c8_i32_62 = arith.constant 8 : i32
    %72 = arith.select %71, %c1_i32_60, %c8_i32_62 : i32
    %73 = arith.minsi %65, %72 : i32
    %74 = arith.cmpi slt, %c1_i32_60, %73 : i32
    %75 = arith.extui %74 : i1 to i32
    %c0_i32_63 = arith.constant 0 : i32
    %76 = arith.cmpi ne, %75, %c0_i32_63 : i32
    scf.if %76 {
      %141 = arith.index_cast %c1_i32_60 : i32 to index
      %c0_95 = arith.constant 0 : index
      %142 = vector.load %arg14[%141, %c0_95] : memref<8x128xf32, #tpu.memory_space<vmem>>, vector<1x128xf32>
      %c0_96 = arith.constant 0 : index
      %c0_97 = arith.constant 0 : index
      %143 = vector.load %arg11[%c0_96, %c0_97] : memref<1x32xf32, #tpu.memory_space<vmem>>, vector<1x32xf32>
      %c0_98 = arith.constant 0 : index
      %c0_99 = arith.constant 0 : index
      %144 = vector.load %arg5[%c0_98, %c0_99] : memref<32x128xf32, #tpu.memory_space<vmem>>, vector<32x128xf32>
      %cst_100 = arith.constant dense<0.000000e+00> : vector<1x128xf32>
      %145 = tpu.matmul %143, %144, %cst_100 {dimension_numbers = #tpu.dot_dimension_numbers<[1], [0], [0], [1], [0, 0, 1, 1], [], []>} : vector<1x32xf32>, vector<32x128xf32>, vector<1x128xf32> -> vector<1x128xf32>
      %146 = arith.addf %142, %145 : vector<1x128xf32>
      %147 = vector.extract_strided_slice %146 {offsets = [0, 0], sizes = [1, 32], strides = [1, 1]} : vector<1x128xf32> to vector<1x32xf32>
      %148 = arith.negf %147 : vector<1x32xf32>
      %149 = math.exp %148 : vector<1x32xf32>
      %cst_101 = arith.constant 1.000000e+00 : f32
      %150 = vector.broadcast %cst_101 : f32 to vector<1x32xf32>
      %151 = arith.addf %150, %149 : vector<1x32xf32>
      %152 = arith.divf %150, %151 : vector<1x32xf32>
      %153 = vector.extract_strided_slice %146 {offsets = [0, 32], sizes = [1, 32], strides = [1, 1]} : vector<1x128xf32> to vector<1x32xf32>
      %154 = arith.negf %153 : vector<1x32xf32>
      %155 = math.exp %154 : vector<1x32xf32>
      %cst_102 = arith.constant 1.000000e+00 : f32
      %156 = vector.broadcast %cst_102 : f32 to vector<1x32xf32>
      %157 = arith.addf %156, %155 : vector<1x32xf32>
      %158 = arith.divf %156, %157 : vector<1x32xf32>
      %159 = vector.extract_strided_slice %146 {offsets = [0, 64], sizes = [1, 32], strides = [1, 1]} : vector<1x128xf32> to vector<1x32xf32>
      %160 = math.tanh %159 : vector<1x32xf32>
      %161 = vector.extract_strided_slice %146 {offsets = [0, 96], sizes = [1, 32], strides = [1, 1]} : vector<1x128xf32> to vector<1x32xf32>
      %162 = arith.negf %161 : vector<1x32xf32>
      %163 = math.exp %162 : vector<1x32xf32>
      %cst_103 = arith.constant 1.000000e+00 : f32
      %164 = vector.broadcast %cst_103 : f32 to vector<1x32xf32>
      %165 = arith.addf %164, %163 : vector<1x32xf32>
      %166 = arith.divf %164, %165 : vector<1x32xf32>
      %c0_104 = arith.constant 0 : index
      %c0_105 = arith.constant 0 : index
      %167 = vector.load %arg12[%c0_104, %c0_105] : memref<1x32xf32, #tpu.memory_space<vmem>>, vector<1x32xf32>
      %168 = arith.mulf %158, %167 : vector<1x32xf32>
      %169 = arith.mulf %152, %160 : vector<1x32xf32>
      %170 = arith.addf %168, %169 : vector<1x32xf32>
      %171 = math.tanh %170 : vector<1x32xf32>
      %172 = arith.mulf %166, %171 : vector<1x32xf32>
      %c0_106 = arith.constant 0 : index
      %c0_107 = arith.constant 0 : index
      %173 = vector.load %arg12[%c0_106, %c0_107] : memref<1x32xf32, #tpu.memory_space<vmem>>, vector<1x32xf32>
      tpu.vector_store %arg12[%c0_106, %c0_107], %170 {strides = array<i32>} : memref<1x32xf32, #tpu.memory_space<vmem>>, vector<1x32xf32>,
      %c0_108 = arith.constant 0 : index
      %c0_109 = arith.constant 0 : index
      %174 = vector.load %arg11[%c0_108, %c0_109] : memref<1x32xf32, #tpu.memory_space<vmem>>, vector<1x32xf32>
      tpu.vector_store %arg11[%c0_108, %c0_109], %172 {strides = array<i32>} : memref<1x32xf32, #tpu.memory_space<vmem>>, vector<1x32xf32>,
      %175 = arith.index_cast %c1_i32_60 : i32 to index
      %c0_110 = arith.constant 0 : index
      %176 = vector.load %arg15[%175, %c0_110] : memref<8x32xf32, #tpu.memory_space<vmem>>, vector<1x32xf32>
      tpu.vector_store %arg15[%175, %c0_110], %172 {strides = array<i32>} : memref<8x32xf32, #tpu.memory_space<vmem>>, vector<1x32xf32>,
    } else {
    }
    %c2_i32 = arith.constant 2 : i32
    %77 = arith.index_cast %c2_i32 : i32 to index
    %78 = memref.load %arg1[%77] : memref<8xi32, #tpu.memory_space<smem>>
    %c1_i32_64 = arith.constant 1 : i32
    %79 = arith.cmpi eq, %78, %c1_i32_64 : i32
    %c8_i32_65 = arith.constant 8 : i32
    %80 = arith.select %79, %c2_i32, %c8_i32_65 : i32
    %81 = arith.minsi %73, %80 : i32
    %82 = arith.cmpi slt, %c2_i32, %81 : i32
    %83 = arith.extui %82 : i1 to i32
    %c0_i32_66 = arith.constant 0 : i32
    %84 = arith.cmpi ne, %83, %c0_i32_66 : i32
    scf.if %84 {
      %141 = arith.index_cast %c2_i32 : i32 to index
      %c0_95 = arith.constant 0 : index
      %142 = vector.load %arg14[%141, %c0_95] : memref<8x128xf32, #tpu.memory_space<vmem>>, vector<1x128xf32>
      %c0_96 = arith.constant 0 : index
      %c0_97 = arith.constant 0 : index
      %143 = vector.load %arg11[%c0_96, %c0_97] : memref<1x32xf32, #tpu.memory_space<vmem>>, vector<1x32xf32>
      %c0_98 = arith.constant 0 : index
      %c0_99 = arith.constant 0 : index
      %144 = vector.load %arg5[%c0_98, %c0_99] : memref<32x128xf32, #tpu.memory_space<vmem>>, vector<32x128xf32>
      %cst_100 = arith.constant dense<0.000000e+00> : vector<1x128xf32>
      %145 = tpu.matmul %143, %144, %cst_100 {dimension_numbers = #tpu.dot_dimension_numbers<[1], [0], [0], [1], [0, 0, 1, 1], [], []>} : vector<1x32xf32>, vector<32x128xf32>, vector<1x128xf32> -> vector<1x128xf32>
      %146 = arith.addf %142, %145 : vector<1x128xf32>
      %147 = vector.extract_strided_slice %146 {offsets = [0, 0], sizes = [1, 32], strides = [1, 1]} : vector<1x128xf32> to vector<1x32xf32>
      %148 = arith.negf %147 : vector<1x32xf32>
      %149 = math.exp %148 : vector<1x32xf32>
      %cst_101 = arith.constant 1.000000e+00 : f32
      %150 = vector.broadcast %cst_101 : f32 to vector<1x32xf32>
      %151 = arith.addf %150, %149 : vector<1x32xf32>
      %152 = arith.divf %150, %151 : vector<1x32xf32>
      %153 = vector.extract_strided_slice %146 {offsets = [0, 32], sizes = [1, 32], strides = [1, 1]} : vector<1x128xf32> to vector<1x32xf32>
      %154 = arith.negf %153 : vector<1x32xf32>
      %155 = math.exp %154 : vector<1x32xf32>
      %cst_102 = arith.constant 1.000000e+00 : f32
      %156 = vector.broadcast %cst_102 : f32 to vector<1x32xf32>
      %157 = arith.addf %156, %155 : vector<1x32xf32>
      %158 = arith.divf %156, %157 : vector<1x32xf32>
      %159 = vector.extract_strided_slice %146 {offsets = [0, 64], sizes = [1, 32], strides = [1, 1]} : vector<1x128xf32> to vector<1x32xf32>
      %160 = math.tanh %159 : vector<1x32xf32>
      %161 = vector.extract_strided_slice %146 {offsets = [0, 96], sizes = [1, 32], strides = [1, 1]} : vector<1x128xf32> to vector<1x32xf32>
      %162 = arith.negf %161 : vector<1x32xf32>
      %163 = math.exp %162 : vector<1x32xf32>
      %cst_103 = arith.constant 1.000000e+00 : f32
      %164 = vector.broadcast %cst_103 : f32 to vector<1x32xf32>
      %165 = arith.addf %164, %163 : vector<1x32xf32>
      %166 = arith.divf %164, %165 : vector<1x32xf32>
      %c0_104 = arith.constant 0 : index
      %c0_105 = arith.constant 0 : index
      %167 = vector.load %arg12[%c0_104, %c0_105] : memref<1x32xf32, #tpu.memory_space<vmem>>, vector<1x32xf32>
      %168 = arith.mulf %158, %167 : vector<1x32xf32>
      %169 = arith.mulf %152, %160 : vector<1x32xf32>
      %170 = arith.addf %168, %169 : vector<1x32xf32>
      %171 = math.tanh %170 : vector<1x32xf32>
      %172 = arith.mulf %166, %171 : vector<1x32xf32>
      %c0_106 = arith.constant 0 : index
      %c0_107 = arith.constant 0 : index
      %173 = vector.load %arg12[%c0_106, %c0_107] : memref<1x32xf32, #tpu.memory_space<vmem>>, vector<1x32xf32>
      tpu.vector_store %arg12[%c0_106, %c0_107], %170 {strides = array<i32>} : memref<1x32xf32, #tpu.memory_space<vmem>>, vector<1x32xf32>,
      %c0_108 = arith.constant 0 : index
      %c0_109 = arith.constant 0 : index
      %174 = vector.load %arg11[%c0_108, %c0_109] : memref<1x32xf32, #tpu.memory_space<vmem>>, vector<1x32xf32>
      tpu.vector_store %arg11[%c0_108, %c0_109], %172 {strides = array<i32>} : memref<1x32xf32, #tpu.memory_space<vmem>>, vector<1x32xf32>,
      %175 = arith.index_cast %c2_i32 : i32 to index
      %c0_110 = arith.constant 0 : index
      %176 = vector.load %arg15[%175, %c0_110] : memref<8x32xf32, #tpu.memory_space<vmem>>, vector<1x32xf32>
      tpu.vector_store %arg15[%175, %c0_110], %172 {strides = array<i32>} : memref<8x32xf32, #tpu.memory_space<vmem>>, vector<1x32xf32>,
    } else {
    }
    %c3_i32 = arith.constant 3 : i32
    %85 = arith.index_cast %c3_i32 : i32 to index
    %86 = memref.load %arg1[%85] : memref<8xi32, #tpu.memory_space<smem>>
    %c1_i32_67 = arith.constant 1 : i32
    %87 = arith.cmpi eq, %86, %c1_i32_67 : i32
    %c8_i32_68 = arith.constant 8 : i32
    %88 = arith.select %87, %c3_i32, %c8_i32_68 : i32
    %89 = arith.minsi %81, %88 : i32
    %90 = arith.cmpi slt, %c3_i32, %89 : i32
    %91 = arith.extui %90 : i1 to i32
    %c0_i32_69 = arith.constant 0 : i32
    %92 = arith.cmpi ne, %91, %c0_i32_69 : i32
    scf.if %92 {
      %141 = arith.index_cast %c3_i32 : i32 to index
      %c0_95 = arith.constant 0 : index
      %142 = vector.load %arg14[%141, %c0_95] : memref<8x128xf32, #tpu.memory_space<vmem>>, vector<1x128xf32>
      %c0_96 = arith.constant 0 : index
      %c0_97 = arith.constant 0 : index
      %143 = vector.load %arg11[%c0_96, %c0_97] : memref<1x32xf32, #tpu.memory_space<vmem>>, vector<1x32xf32>
      %c0_98 = arith.constant 0 : index
      %c0_99 = arith.constant 0 : index
      %144 = vector.load %arg5[%c0_98, %c0_99] : memref<32x128xf32, #tpu.memory_space<vmem>>, vector<32x128xf32>
      %cst_100 = arith.constant dense<0.000000e+00> : vector<1x128xf32>
      %145 = tpu.matmul %143, %144, %cst_100 {dimension_numbers = #tpu.dot_dimension_numbers<[1], [0], [0], [1], [0, 0, 1, 1], [], []>} : vector<1x32xf32>, vector<32x128xf32>, vector<1x128xf32> -> vector<1x128xf32>
      %146 = arith.addf %142, %145 : vector<1x128xf32>
      %147 = vector.extract_strided_slice %146 {offsets = [0, 0], sizes = [1, 32], strides = [1, 1]} : vector<1x128xf32> to vector<1x32xf32>
      %148 = arith.negf %147 : vector<1x32xf32>
      %149 = math.exp %148 : vector<1x32xf32>
      %cst_101 = arith.constant 1.000000e+00 : f32
      %150 = vector.broadcast %cst_101 : f32 to vector<1x32xf32>
      %151 = arith.addf %150, %149 : vector<1x32xf32>
      %152 = arith.divf %150, %151 : vector<1x32xf32>
      %153 = vector.extract_strided_slice %146 {offsets = [0, 32], sizes = [1, 32], strides = [1, 1]} : vector<1x128xf32> to vector<1x32xf32>
      %154 = arith.negf %153 : vector<1x32xf32>
      %155 = math.exp %154 : vector<1x32xf32>
      %cst_102 = arith.constant 1.000000e+00 : f32
      %156 = vector.broadcast %cst_102 : f32 to vector<1x32xf32>
      %157 = arith.addf %156, %155 : vector<1x32xf32>
      %158 = arith.divf %156, %157 : vector<1x32xf32>
      %159 = vector.extract_strided_slice %146 {offsets = [0, 64], sizes = [1, 32], strides = [1, 1]} : vector<1x128xf32> to vector<1x32xf32>
      %160 = math.tanh %159 : vector<1x32xf32>
      %161 = vector.extract_strided_slice %146 {offsets = [0, 96], sizes = [1, 32], strides = [1, 1]} : vector<1x128xf32> to vector<1x32xf32>
      %162 = arith.negf %161 : vector<1x32xf32>
      %163 = math.exp %162 : vector<1x32xf32>
      %cst_103 = arith.constant 1.000000e+00 : f32
      %164 = vector.broadcast %cst_103 : f32 to vector<1x32xf32>
      %165 = arith.addf %164, %163 : vector<1x32xf32>
      %166 = arith.divf %164, %165 : vector<1x32xf32>
      %c0_104 = arith.constant 0 : index
      %c0_105 = arith.constant 0 : index
      %167 = vector.load %arg12[%c0_104, %c0_105] : memref<1x32xf32, #tpu.memory_space<vmem>>, vector<1x32xf32>
      %168 = arith.mulf %158, %167 : vector<1x32xf32>
      %169 = arith.mulf %152, %160 : vector<1x32xf32>
      %170 = arith.addf %168, %169 : vector<1x32xf32>
      %171 = math.tanh %170 : vector<1x32xf32>
      %172 = arith.mulf %166, %171 : vector<1x32xf32>
      %c0_106 = arith.constant 0 : index
      %c0_107 = arith.constant 0 : index
      %173 = vector.load %arg12[%c0_106, %c0_107] : memref<1x32xf32, #tpu.memory_space<vmem>>, vector<1x32xf32>
      tpu.vector_store %arg12[%c0_106, %c0_107], %170 {strides = array<i32>} : memref<1x32xf32, #tpu.memory_space<vmem>>, vector<1x32xf32>,
      %c0_108 = arith.constant 0 : index
      %c0_109 = arith.constant 0 : index
      %174 = vector.load %arg11[%c0_108, %c0_109] : memref<1x32xf32, #tpu.memory_space<vmem>>, vector<1x32xf32>
      tpu.vector_store %arg11[%c0_108, %c0_109], %172 {strides = array<i32>} : memref<1x32xf32, #tpu.memory_space<vmem>>, vector<1x32xf32>,
      %175 = arith.index_cast %c3_i32 : i32 to index
      %c0_110 = arith.constant 0 : index
      %176 = vector.load %arg15[%175, %c0_110] : memref<8x32xf32, #tpu.memory_space<vmem>>, vector<1x32xf32>
      tpu.vector_store %arg15[%175, %c0_110], %172 {strides = array<i32>} : memref<8x32xf32, #tpu.memory_space<vmem>>, vector<1x32xf32>,
    } else {
    }
    %c4_i32 = arith.constant 4 : i32
    %93 = arith.index_cast %c4_i32 : i32 to index
    %94 = memref.load %arg1[%93] : memref<8xi32, #tpu.memory_space<smem>>
    %c1_i32_70 = arith.constant 1 : i32
    %95 = arith.cmpi eq, %94, %c1_i32_70 : i32
    %c8_i32_71 = arith.constant 8 : i32
    %96 = arith.select %95, %c4_i32, %c8_i32_71 : i32
    %97 = arith.minsi %89, %96 : i32
    %98 = arith.cmpi slt, %c4_i32, %97 : i32
    %99 = arith.extui %98 : i1 to i32
    %c0_i32_72 = arith.constant 0 : i32
    %100 = arith.cmpi ne, %99, %c0_i32_72 : i32
    scf.if %100 {
      %141 = arith.index_cast %c4_i32 : i32 to index
      %c0_95 = arith.constant 0 : index
      %142 = vector.load %arg14[%141, %c0_95] : memref<8x128xf32, #tpu.memory_space<vmem>>, vector<1x128xf32>
      %c0_96 = arith.constant 0 : index
      %c0_97 = arith.constant 0 : index
      %143 = vector.load %arg11[%c0_96, %c0_97] : memref<1x32xf32, #tpu.memory_space<vmem>>, vector<1x32xf32>
      %c0_98 = arith.constant 0 : index
      %c0_99 = arith.constant 0 : index
      %144 = vector.load %arg5[%c0_98, %c0_99] : memref<32x128xf32, #tpu.memory_space<vmem>>, vector<32x128xf32>
      %cst_100 = arith.constant dense<0.000000e+00> : vector<1x128xf32>
      %145 = tpu.matmul %143, %144, %cst_100 {dimension_numbers = #tpu.dot_dimension_numbers<[1], [0], [0], [1], [0, 0, 1, 1], [], []>} : vector<1x32xf32>, vector<32x128xf32>, vector<1x128xf32> -> vector<1x128xf32>
      %146 = arith.addf %142, %145 : vector<1x128xf32>
      %147 = vector.extract_strided_slice %146 {offsets = [0, 0], sizes = [1, 32], strides = [1, 1]} : vector<1x128xf32> to vector<1x32xf32>
      %148 = arith.negf %147 : vector<1x32xf32>
      %149 = math.exp %148 : vector<1x32xf32>
      %cst_101 = arith.constant 1.000000e+00 : f32
      %150 = vector.broadcast %cst_101 : f32 to vector<1x32xf32>
      %151 = arith.addf %150, %149 : vector<1x32xf32>
      %152 = arith.divf %150, %151 : vector<1x32xf32>
      %153 = vector.extract_strided_slice %146 {offsets = [0, 32], sizes = [1, 32], strides = [1, 1]} : vector<1x128xf32> to vector<1x32xf32>
      %154 = arith.negf %153 : vector<1x32xf32>
      %155 = math.exp %154 : vector<1x32xf32>
      %cst_102 = arith.constant 1.000000e+00 : f32
      %156 = vector.broadcast %cst_102 : f32 to vector<1x32xf32>
      %157 = arith.addf %156, %155 : vector<1x32xf32>
      %158 = arith.divf %156, %157 : vector<1x32xf32>
      %159 = vector.extract_strided_slice %146 {offsets = [0, 64], sizes = [1, 32], strides = [1, 1]} : vector<1x128xf32> to vector<1x32xf32>
      %160 = math.tanh %159 : vector<1x32xf32>
      %161 = vector.extract_strided_slice %146 {offsets = [0, 96], sizes = [1, 32], strides = [1, 1]} : vector<1x128xf32> to vector<1x32xf32>
      %162 = arith.negf %161 : vector<1x32xf32>
      %163 = math.exp %162 : vector<1x32xf32>
      %cst_103 = arith.constant 1.000000e+00 : f32
      %164 = vector.broadcast %cst_103 : f32 to vector<1x32xf32>
      %165 = arith.addf %164, %163 : vector<1x32xf32>
      %166 = arith.divf %164, %165 : vector<1x32xf32>
      %c0_104 = arith.constant 0 : index
      %c0_105 = arith.constant 0 : index
      %167 = vector.load %arg12[%c0_104, %c0_105] : memref<1x32xf32, #tpu.memory_space<vmem>>, vector<1x32xf32>
      %168 = arith.mulf %158, %167 : vector<1x32xf32>
      %169 = arith.mulf %152, %160 : vector<1x32xf32>
      %170 = arith.addf %168, %169 : vector<1x32xf32>
      %171 = math.tanh %170 : vector<1x32xf32>
      %172 = arith.mulf %166, %171 : vector<1x32xf32>
      %c0_106 = arith.constant 0 : index
      %c0_107 = arith.constant 0 : index
      %173 = vector.load %arg12[%c0_106, %c0_107] : memref<1x32xf32, #tpu.memory_space<vmem>>, vector<1x32xf32>
      tpu.vector_store %arg12[%c0_106, %c0_107], %170 {strides = array<i32>} : memref<1x32xf32, #tpu.memory_space<vmem>>, vector<1x32xf32>,
      %c0_108 = arith.constant 0 : index
      %c0_109 = arith.constant 0 : index
      %174 = vector.load %arg11[%c0_108, %c0_109] : memref<1x32xf32, #tpu.memory_space<vmem>>, vector<1x32xf32>
      tpu.vector_store %arg11[%c0_108, %c0_109], %172 {strides = array<i32>} : memref<1x32xf32, #tpu.memory_space<vmem>>, vector<1x32xf32>,
      %175 = arith.index_cast %c4_i32 : i32 to index
      %c0_110 = arith.constant 0 : index
      %176 = vector.load %arg15[%175, %c0_110] : memref<8x32xf32, #tpu.memory_space<vmem>>, vector<1x32xf32>
      tpu.vector_store %arg15[%175, %c0_110], %172 {strides = array<i32>} : memref<8x32xf32, #tpu.memory_space<vmem>>, vector<1x32xf32>,
    } else {
    }
    %c5_i32 = arith.constant 5 : i32
    %101 = arith.index_cast %c5_i32 : i32 to index
    %102 = memref.load %arg1[%101] : memref<8xi32, #tpu.memory_space<smem>>
    %c1_i32_73 = arith.constant 1 : i32
    %103 = arith.cmpi eq, %102, %c1_i32_73 : i32
    %c8_i32_74 = arith.constant 8 : i32
    %104 = arith.select %103, %c5_i32, %c8_i32_74 : i32
    %105 = arith.minsi %97, %104 : i32
    %106 = arith.cmpi slt, %c5_i32, %105 : i32
    %107 = arith.extui %106 : i1 to i32
    %c0_i32_75 = arith.constant 0 : i32
    %108 = arith.cmpi ne, %107, %c0_i32_75 : i32
    scf.if %108 {
      %141 = arith.index_cast %c5_i32 : i32 to index
      %c0_95 = arith.constant 0 : index
      %142 = vector.load %arg14[%141, %c0_95] : memref<8x128xf32, #tpu.memory_space<vmem>>, vector<1x128xf32>
      %c0_96 = arith.constant 0 : index
      %c0_97 = arith.constant 0 : index
      %143 = vector.load %arg11[%c0_96, %c0_97] : memref<1x32xf32, #tpu.memory_space<vmem>>, vector<1x32xf32>
      %c0_98 = arith.constant 0 : index
      %c0_99 = arith.constant 0 : index
      %144 = vector.load %arg5[%c0_98, %c0_99] : memref<32x128xf32, #tpu.memory_space<vmem>>, vector<32x128xf32>
      %cst_100 = arith.constant dense<0.000000e+00> : vector<1x128xf32>
      %145 = tpu.matmul %143, %144, %cst_100 {dimension_numbers = #tpu.dot_dimension_numbers<[1], [0], [0], [1], [0, 0, 1, 1], [], []>} : vector<1x32xf32>, vector<32x128xf32>, vector<1x128xf32> -> vector<1x128xf32>
      %146 = arith.addf %142, %145 : vector<1x128xf32>
      %147 = vector.extract_strided_slice %146 {offsets = [0, 0], sizes = [1, 32], strides = [1, 1]} : vector<1x128xf32> to vector<1x32xf32>
      %148 = arith.negf %147 : vector<1x32xf32>
      %149 = math.exp %148 : vector<1x32xf32>
      %cst_101 = arith.constant 1.000000e+00 : f32
      %150 = vector.broadcast %cst_101 : f32 to vector<1x32xf32>
      %151 = arith.addf %150, %149 : vector<1x32xf32>
      %152 = arith.divf %150, %151 : vector<1x32xf32>
      %153 = vector.extract_strided_slice %146 {offsets = [0, 32], sizes = [1, 32], strides = [1, 1]} : vector<1x128xf32> to vector<1x32xf32>
      %154 = arith.negf %153 : vector<1x32xf32>
      %155 = math.exp %154 : vector<1x32xf32>
      %cst_102 = arith.constant 1.000000e+00 : f32
      %156 = vector.broadcast %cst_102 : f32 to vector<1x32xf32>
      %157 = arith.addf %156, %155 : vector<1x32xf32>
      %158 = arith.divf %156, %157 : vector<1x32xf32>
      %159 = vector.extract_strided_slice %146 {offsets = [0, 64], sizes = [1, 32], strides = [1, 1]} : vector<1x128xf32> to vector<1x32xf32>
      %160 = math.tanh %159 : vector<1x32xf32>
      %161 = vector.extract_strided_slice %146 {offsets = [0, 96], sizes = [1, 32], strides = [1, 1]} : vector<1x128xf32> to vector<1x32xf32>
      %162 = arith.negf %161 : vector<1x32xf32>
      %163 = math.exp %162 : vector<1x32xf32>
      %cst_103 = arith.constant 1.000000e+00 : f32
      %164 = vector.broadcast %cst_103 : f32 to vector<1x32xf32>
      %165 = arith.addf %164, %163 : vector<1x32xf32>
      %166 = arith.divf %164, %165 : vector<1x32xf32>
      %c0_104 = arith.constant 0 : index
      %c0_105 = arith.constant 0 : index
      %167 = vector.load %arg12[%c0_104, %c0_105] : memref<1x32xf32, #tpu.memory_space<vmem>>, vector<1x32xf32>
      %168 = arith.mulf %158, %167 : vector<1x32xf32>
      %169 = arith.mulf %152, %160 : vector<1x32xf32>
      %170 = arith.addf %168, %169 : vector<1x32xf32>
      %171 = math.tanh %170 : vector<1x32xf32>
      %172 = arith.mulf %166, %171 : vector<1x32xf32>
      %c0_106 = arith.constant 0 : index
      %c0_107 = arith.constant 0 : index
      %173 = vector.load %arg12[%c0_106, %c0_107] : memref<1x32xf32, #tpu.memory_space<vmem>>, vector<1x32xf32>
      tpu.vector_store %arg12[%c0_106, %c0_107], %170 {strides = array<i32>} : memref<1x32xf32, #tpu.memory_space<vmem>>, vector<1x32xf32>,
      %c0_108 = arith.constant 0 : index
      %c0_109 = arith.constant 0 : index
      %174 = vector.load %arg11[%c0_108, %c0_109] : memref<1x32xf32, #tpu.memory_space<vmem>>, vector<1x32xf32>
      tpu.vector_store %arg11[%c0_108, %c0_109], %172 {strides = array<i32>} : memref<1x32xf32, #tpu.memory_space<vmem>>, vector<1x32xf32>,
      %175 = arith.index_cast %c5_i32 : i32 to index
      %c0_110 = arith.constant 0 : index
      %176 = vector.load %arg15[%175, %c0_110] : memref<8x32xf32, #tpu.memory_space<vmem>>, vector<1x32xf32>
      tpu.vector_store %arg15[%175, %c0_110], %172 {strides = array<i32>} : memref<8x32xf32, #tpu.memory_space<vmem>>, vector<1x32xf32>,
    } else {
    }
    %c6_i32 = arith.constant 6 : i32
    %109 = arith.index_cast %c6_i32 : i32 to index
    %110 = memref.load %arg1[%109] : memref<8xi32, #tpu.memory_space<smem>>
    %c1_i32_76 = arith.constant 1 : i32
    %111 = arith.cmpi eq, %110, %c1_i32_76 : i32
    %c8_i32_77 = arith.constant 8 : i32
    %112 = arith.select %111, %c6_i32, %c8_i32_77 : i32
    %113 = arith.minsi %105, %112 : i32
    %114 = arith.cmpi slt, %c6_i32, %113 : i32
    %115 = arith.extui %114 : i1 to i32
    %c0_i32_78 = arith.constant 0 : i32
    %116 = arith.cmpi ne, %115, %c0_i32_78 : i32
    scf.if %116 {
      %141 = arith.index_cast %c6_i32 : i32 to index
      %c0_95 = arith.constant 0 : index
      %142 = vector.load %arg14[%141, %c0_95] : memref<8x128xf32, #tpu.memory_space<vmem>>, vector<1x128xf32>
      %c0_96 = arith.constant 0 : index
      %c0_97 = arith.constant 0 : index
      %143 = vector.load %arg11[%c0_96, %c0_97] : memref<1x32xf32, #tpu.memory_space<vmem>>, vector<1x32xf32>
      %c0_98 = arith.constant 0 : index
      %c0_99 = arith.constant 0 : index
      %144 = vector.load %arg5[%c0_98, %c0_99] : memref<32x128xf32, #tpu.memory_space<vmem>>, vector<32x128xf32>
      %cst_100 = arith.constant dense<0.000000e+00> : vector<1x128xf32>
      %145 = tpu.matmul %143, %144, %cst_100 {dimension_numbers = #tpu.dot_dimension_numbers<[1], [0], [0], [1], [0, 0, 1, 1], [], []>} : vector<1x32xf32>, vector<32x128xf32>, vector<1x128xf32> -> vector<1x128xf32>
      %146 = arith.addf %142, %145 : vector<1x128xf32>
      %147 = vector.extract_strided_slice %146 {offsets = [0, 0], sizes = [1, 32], strides = [1, 1]} : vector<1x128xf32> to vector<1x32xf32>
      %148 = arith.negf %147 : vector<1x32xf32>
      %149 = math.exp %148 : vector<1x32xf32>
      %cst_101 = arith.constant 1.000000e+00 : f32
      %150 = vector.broadcast %cst_101 : f32 to vector<1x32xf32>
      %151 = arith.addf %150, %149 : vector<1x32xf32>
      %152 = arith.divf %150, %151 : vector<1x32xf32>
      %153 = vector.extract_strided_slice %146 {offsets = [0, 32], sizes = [1, 32], strides = [1, 1]} : vector<1x128xf32> to vector<1x32xf32>
      %154 = arith.negf %153 : vector<1x32xf32>
      %155 = math.exp %154 : vector<1x32xf32>
      %cst_102 = arith.constant 1.000000e+00 : f32
      %156 = vector.broadcast %cst_102 : f32 to vector<1x32xf32>
      %157 = arith.addf %156, %155 : vector<1x32xf32>
      %158 = arith.divf %156, %157 : vector<1x32xf32>
      %159 = vector.extract_strided_slice %146 {offsets = [0, 64], sizes = [1, 32], strides = [1, 1]} : vector<1x128xf32> to vector<1x32xf32>
      %160 = math.tanh %159 : vector<1x32xf32>
      %161 = vector.extract_strided_slice %146 {offsets = [0, 96], sizes = [1, 32], strides = [1, 1]} : vector<1x128xf32> to vector<1x32xf32>
      %162 = arith.negf %161 : vector<1x32xf32>
      %163 = math.exp %162 : vector<1x32xf32>
      %cst_103 = arith.constant 1.000000e+00 : f32
      %164 = vector.broadcast %cst_103 : f32 to vector<1x32xf32>
      %165 = arith.addf %164, %163 : vector<1x32xf32>
      %166 = arith.divf %164, %165 : vector<1x32xf32>
      %c0_104 = arith.constant 0 : index
      %c0_105 = arith.constant 0 : index
      %167 = vector.load %arg12[%c0_104, %c0_105] : memref<1x32xf32, #tpu.memory_space<vmem>>, vector<1x32xf32>
      %168 = arith.mulf %158, %167 : vector<1x32xf32>
      %169 = arith.mulf %152, %160 : vector<1x32xf32>
      %170 = arith.addf %168, %169 : vector<1x32xf32>
      %171 = math.tanh %170 : vector<1x32xf32>
      %172 = arith.mulf %166, %171 : vector<1x32xf32>
      %c0_106 = arith.constant 0 : index
      %c0_107 = arith.constant 0 : index
      %173 = vector.load %arg12[%c0_106, %c0_107] : memref<1x32xf32, #tpu.memory_space<vmem>>, vector<1x32xf32>
      tpu.vector_store %arg12[%c0_106, %c0_107], %170 {strides = array<i32>} : memref<1x32xf32, #tpu.memory_space<vmem>>, vector<1x32xf32>,
      %c0_108 = arith.constant 0 : index
      %c0_109 = arith.constant 0 : index
      %174 = vector.load %arg11[%c0_108, %c0_109] : memref<1x32xf32, #tpu.memory_space<vmem>>, vector<1x32xf32>
      tpu.vector_store %arg11[%c0_108, %c0_109], %172 {strides = array<i32>} : memref<1x32xf32, #tpu.memory_space<vmem>>, vector<1x32xf32>,
      %175 = arith.index_cast %c6_i32 : i32 to index
      %c0_110 = arith.constant 0 : index
      %176 = vector.load %arg15[%175, %c0_110] : memref<8x32xf32, #tpu.memory_space<vmem>>, vector<1x32xf32>
      tpu.vector_store %arg15[%175, %c0_110], %172 {strides = array<i32>} : memref<8x32xf32, #tpu.memory_space<vmem>>, vector<1x32xf32>,
    } else {
    }
    %c7_i32 = arith.constant 7 : i32
    %117 = arith.index_cast %c7_i32 : i32 to index
    %118 = memref.load %arg1[%117] : memref<8xi32, #tpu.memory_space<smem>>
    %c1_i32_79 = arith.constant 1 : i32
    %119 = arith.cmpi eq, %118, %c1_i32_79 : i32
    %c8_i32_80 = arith.constant 8 : i32
    %120 = arith.select %119, %c7_i32, %c8_i32_80 : i32
    %121 = arith.minsi %113, %120 : i32
    %122 = arith.cmpi slt, %c7_i32, %121 : i32
    %123 = arith.extui %122 : i1 to i32
    %c0_i32_81 = arith.constant 0 : i32
    %124 = arith.cmpi ne, %123, %c0_i32_81 : i32
    scf.if %124 {
      %141 = arith.index_cast %c7_i32 : i32 to index
      %c0_95 = arith.constant 0 : index
      %142 = vector.load %arg14[%141, %c0_95] : memref<8x128xf32, #tpu.memory_space<vmem>>, vector<1x128xf32>
      %c0_96 = arith.constant 0 : index
      %c0_97 = arith.constant 0 : index
      %143 = vector.load %arg11[%c0_96, %c0_97] : memref<1x32xf32, #tpu.memory_space<vmem>>, vector<1x32xf32>
      %c0_98 = arith.constant 0 : index
      %c0_99 = arith.constant 0 : index
      %144 = vector.load %arg5[%c0_98, %c0_99] : memref<32x128xf32, #tpu.memory_space<vmem>>, vector<32x128xf32>
      %cst_100 = arith.constant dense<0.000000e+00> : vector<1x128xf32>
      %145 = tpu.matmul %143, %144, %cst_100 {dimension_numbers = #tpu.dot_dimension_numbers<[1], [0], [0], [1], [0, 0, 1, 1], [], []>} : vector<1x32xf32>, vector<32x128xf32>, vector<1x128xf32> -> vector<1x128xf32>
      %146 = arith.addf %142, %145 : vector<1x128xf32>
      %147 = vector.extract_strided_slice %146 {offsets = [0, 0], sizes = [1, 32], strides = [1, 1]} : vector<1x128xf32> to vector<1x32xf32>
      %148 = arith.negf %147 : vector<1x32xf32>
      %149 = math.exp %148 : vector<1x32xf32>
      %cst_101 = arith.constant 1.000000e+00 : f32
      %150 = vector.broadcast %cst_101 : f32 to vector<1x32xf32>
      %151 = arith.addf %150, %149 : vector<1x32xf32>
      %152 = arith.divf %150, %151 : vector<1x32xf32>
      %153 = vector.extract_strided_slice %146 {offsets = [0, 32], sizes = [1, 32], strides = [1, 1]} : vector<1x128xf32> to vector<1x32xf32>
      %154 = arith.negf %153 : vector<1x32xf32>
      %155 = math.exp %154 : vector<1x32xf32>
      %cst_102 = arith.constant 1.000000e+00 : f32
      %156 = vector.broadcast %cst_102 : f32 to vector<1x32xf32>
      %157 = arith.addf %156, %155 : vector<1x32xf32>
      %158 = arith.divf %156, %157 : vector<1x32xf32>
      %159 = vector.extract_strided_slice %146 {offsets = [0, 64], sizes = [1, 32], strides = [1, 1]} : vector<1x128xf32> to vector<1x32xf32>
      %160 = math.tanh %159 : vector<1x32xf32>
      %161 = vector.extract_strided_slice %146 {offsets = [0, 96], sizes = [1, 32], strides = [1, 1]} : vector<1x128xf32> to vector<1x32xf32>
      %162 = arith.negf %161 : vector<1x32xf32>
      %163 = math.exp %162 : vector<1x32xf32>
      %cst_103 = arith.constant 1.000000e+00 : f32
      %164 = vector.broadcast %cst_103 : f32 to vector<1x32xf32>
      %165 = arith.addf %164, %163 : vector<1x32xf32>
      %166 = arith.divf %164, %165 : vector<1x32xf32>
      %c0_104 = arith.constant 0 : index
      %c0_105 = arith.constant 0 : index
      %167 = vector.load %arg12[%c0_104, %c0_105] : memref<1x32xf32, #tpu.memory_space<vmem>>, vector<1x32xf32>
      %168 = arith.mulf %158, %167 : vector<1x32xf32>
      %169 = arith.mulf %152, %160 : vector<1x32xf32>
      %170 = arith.addf %168, %169 : vector<1x32xf32>
      %171 = math.tanh %170 : vector<1x32xf32>
      %172 = arith.mulf %166, %171 : vector<1x32xf32>
      %c0_106 = arith.constant 0 : index
      %c0_107 = arith.constant 0 : index
      %173 = vector.load %arg12[%c0_106, %c0_107] : memref<1x32xf32, #tpu.memory_space<vmem>>, vector<1x32xf32>
      tpu.vector_store %arg12[%c0_106, %c0_107], %170 {strides = array<i32>} : memref<1x32xf32, #tpu.memory_space<vmem>>, vector<1x32xf32>,
      %c0_108 = arith.constant 0 : index
      %c0_109 = arith.constant 0 : index
      %174 = vector.load %arg11[%c0_108, %c0_109] : memref<1x32xf32, #tpu.memory_space<vmem>>, vector<1x32xf32>
      tpu.vector_store %arg11[%c0_108, %c0_109], %172 {strides = array<i32>} : memref<1x32xf32, #tpu.memory_space<vmem>>, vector<1x32xf32>,
      %175 = arith.index_cast %c7_i32 : i32 to index
      %c0_110 = arith.constant 0 : index
      %176 = vector.load %arg15[%175, %c0_110] : memref<8x32xf32, #tpu.memory_space<vmem>>, vector<1x32xf32>
      tpu.vector_store %arg15[%175, %c0_110], %172 {strides = array<i32>} : memref<8x32xf32, #tpu.memory_space<vmem>>, vector<1x32xf32>,
    } else {
    }
    %c8_i32_82 = arith.constant 8 : i32
    %c0_83 = arith.constant 0 : index
    %c0_84 = arith.constant 0 : index
    %125 = vector.load %arg15[%c0_83, %c0_84] : memref<8x32xf32, #tpu.memory_space<vmem>>, vector<8x32xf32>
    %c0_85 = arith.constant 0 : index
    %c0_86 = arith.constant 0 : index
    %126 = vector.load %arg7[%c0_85, %c0_86] : memref<32x128xf32, #tpu.memory_space<vmem>>, vector<32x128xf32>
    %cst_87 = arith.constant dense<0.000000e+00> : vector<8x128xf32>
    %127 = tpu.matmul %125, %126, %cst_87 {dimension_numbers = #tpu.dot_dimension_numbers<[1], [0], [0], [1], [0, 0, 1, 1], [], []>} : vector<8x32xf32>, vector<32x128xf32>, vector<8x128xf32> -> vector<8x128xf32>
    %c0_88 = arith.constant 0 : index
    %c0_89 = arith.constant 0 : index
    %128 = vector.load %arg8[%c0_88, %c0_89] : memref<1x128xf32, #tpu.memory_space<vmem>>, vector<1x128xf32>
    %129 = vector.broadcast %128 : vector<1x128xf32> to vector<8x128xf32>
    %130 = arith.addf %127, %129 : vector<8x128xf32>
    %cst_90 = arith.constant 0.000000e+00 : f32
    %131 = vector.broadcast %cst_90 : f32 to vector<8x128xf32>
    %132 = arith.maximumf %130, %131 : vector<8x128xf32>
    %133 = tpu.iota {dimensions = array<i32: 0>} : vector<8x128xi32>
    %134 = vector.broadcast %121 : i32 to vector<8x128xi32>
    %135 = arith.cmpi sge, %133, %134 : vector<8x128xi32>
    %c0_91 = arith.constant 0 : index
    %c0_92 = arith.constant 0 : index
    %136 = vector.load %arg9[%c0_91, %c0_92] : memref<1x128xf32, #tpu.memory_space<vmem>>, vector<1x128xf32>
    %137 = vector.shape_cast %136 : vector<1x128xf32> to vector<1x128xf32>
    %138 = vector.broadcast %137 : vector<1x128xf32> to vector<8x128xf32>
    %139 = arith.select %135, %138, %132 : vector<8x128xi1>, vector<8x128xf32>
    %c0_93 = arith.constant 0 : index
    %c0_94 = arith.constant 0 : index
    %140 = vector.load %arg10[%c0_93, %c0_94] : memref<8x128xf32, #tpu.memory_space<vmem>>, vector<8x128xf32>
    tpu.vector_store %arg10[%c0_93, %c0_94], %139 {strides = array<i32>} : memref<8x128xf32, #tpu.memory_space<vmem>>, vector<8x128xf32>,
    return
  }
  func.func @transform_0(%arg0: i32, %arg1: memref<8xi32, #tpu.memory_space<smem>>) -> (i32, i32) {
    %c0_i32 = arith.constant 0 : i32
    %c0_i32_0 = arith.constant 0 : i32
    %c0_i32_1 = arith.constant 0 : i32
    return %c0_i32, %c0_i32_0 : i32, i32
  }
  func.func @transform_1(%arg0: i32, %arg1: memref<8xi32, #tpu.memory_space<smem>>) -> (i32, i32) {
    %c0_i32 = arith.constant 0 : i32
    %c0_i32_0 = arith.constant 0 : i32
    %c0_i32_1 = arith.constant 0 : i32
    return %c0_i32, %c0_i32_0 : i32, i32
  }
  func.func @transform_2(%arg0: i32, %arg1: memref<8xi32, #tpu.memory_space<smem>>) -> (i32, i32) {
    %c0_i32 = arith.constant 0 : i32
    %c0_i32_0 = arith.constant 0 : i32
    %c0_i32_1 = arith.constant 0 : i32
    return %c0_i32, %c0_i32_0 : i32, i32
  }
  func.func @transform_3(%arg0: i32, %arg1: memref<8xi32, #tpu.memory_space<smem>>) -> (i32, i32) {
    %c0_i32 = arith.constant 0 : i32
    %c0_i32_0 = arith.constant 0 : i32
    %c0_i32_1 = arith.constant 0 : i32
    return %c0_i32, %c0_i32_0 : i32, i32
  }
  func.func @transform_4(%arg0: i32, %arg1: memref<8xi32, #tpu.memory_space<smem>>) -> (i32, i32) {
    %c0_i32 = arith.constant 0 : i32
    %c0_i32_0 = arith.constant 0 : i32
    %c0_i32_1 = arith.constant 0 : i32
    return %c0_i32, %c0_i32_0 : i32, i32
  }
  func.func @transform_5(%arg0: i32, %arg1: memref<8xi32, #tpu.memory_space<smem>>) -> (i32, i32) {
    %c0_i32 = arith.constant 0 : i32
    %c0_i32_0 = arith.constant 0 : i32
    %c0_i32_1 = arith.constant 0 : i32
    return %c0_i32, %c0_i32_0 : i32, i32
  }
  func.func @transform_6(%arg0: i32, %arg1: memref<8xi32, #tpu.memory_space<smem>>) -> (i32, i32) {
    %c0_i32 = arith.constant 0 : i32
    %c0_i32_0 = arith.constant 0 : i32
    %c0_i32_1 = arith.constant 0 : i32
    return %c0_i32, %c0_i32_0 : i32, i32
  }
  func.func @transform_7(%arg0: i32, %arg1: memref<8xi32, #tpu.memory_space<smem>>) -> (i32, i32) {
    %c0_i32 = arith.constant 0 : i32
    %c0_i32_0 = arith.constant 0 : i32
    %c0_i32_1 = arith.constant 0 : i32
    return %c0_i32, %c0_i32_0 : i32, i32
  }
  func.func @transform_8(%arg0: i32, %arg1: memref<8xi32, #tpu.memory_space<smem>>) -> (i32, i32) {
    %c0_i32 = arith.constant 0 : i32
    %c0_i32_0 = arith.constant 0 : i32
    %c0_i32_1 = arith.constant 0 : i32
    return %c0_i32, %c0_i32_0 : i32, i32
  }
}

</mosaic_0001>

<llo_original>
// kernel: tpu_custom_call.1
$region0: #{tpu_custom_call.1}
  #allocation0 [shape = 'u32[]', space=smem, size = 0x4, offset = 0x4, fixed_abs, tag = 'smem constant byte address 0x4 - core index']
  #allocation1 [shape = 'u32[72,128]{1,0:T(1,128)}', space=vmem, size = 0x9000, scoped, tag = 'internal scratch']
  #allocation2 [shape = 'f32[1,32]{1,0:T(1,128)}', space=vmem, size = 0x200, scoped, tag = 'scratch operand']
  #allocation3 [shape = 'f32[1,32]{1,0:T(1,128)}', space=vmem, size = 0x200, scoped, tag = 'scratch operand']
  #allocation4 [shape = 'f32[8,32]{1,0:T(8,128)}', space=vmem, size = 0x1000, scoped, tag = 'scratch operand']
  #allocation5 [shape = 'f32[8,128]{1,0:T(8,128)}', space=vmem, size = 0x1000, scoped, tag = 'scratch operand']
  #allocation6 [shape = 'f32[8,32]{1,0:T(8,128)}', space=vmem, size = 0x1000, scoped, tag = 'scratch operand']
  #allocation7 [shape = 's32[1]{0}', space=sflag, size = 0x4, scoped, tag = 'scoped memory for tpu_custom_call.1']
  #allocation8 [shape = 'u8[512]{0}', space=smem, size = 0x200, scoped, tag = 'prefetched SMEM operand 0']
  %s0 = inlined_call_operand.hbm [shape: s32[8], index: 0, kind: input, shape index: {}]
  %s1 = inlined_call_operand.hbm [shape: f32[1,32], index: 1, kind: input, shape index: {}]
  %s2 = inlined_call_operand.hbm [shape: f32[16,32], index: 2, kind: input, shape index: {}]
  %s3 = inlined_call_operand.hbm [shape: f32[32,128], index: 3, kind: input, shape index: {}]
  %s4 = inlined_call_operand.hbm [shape: f32[32,128], index: 4, kind: input, shape index: {}]
  %s5 = inlined_call_operand.vmem [shape: f32[1,128], index: 5, kind: input, shape index: {}]
  %s6 = inlined_call_operand.hbm [shape: f32[32,128], index: 6, kind: input, shape index: {}]
  %s7 = inlined_call_operand.vmem [shape: f32[1,128], index: 7, kind: input, shape index: {}]
  %s8 = inlined_call_operand.vmem [shape: f32[1,128], index: 8, kind: input, shape index: {}]
  %s9 = inlined_call_operand.hbm [shape: f32[8,128], index: 9, kind: output, shape index: {}]
  %s10 = sld [smem:[#allocation0]]
  $region94: #{tpu_custom_call.1} parent=0
    _
  %s12 = ssub.s32 1, %s10
  %s13 = scalar_select 0, %s12, %s10
  %s15 = sshll.u32 %s0, 4
  %s16 = int_to_ptr.hbm [resolvable:$true] %s15
  %18 = dma.hbm_to_smem %s16, 16, [#allocation8], [#allocation7]
  %20 = dma.done [#allocation7], 16
  %21 = sfence
  $region1: #{tpu_custom_call.1} parent=0
    #allocation9 [shape = 'u8[512]{0}', space=vmem, size = 0x400, scoped, tag = 'input window, operand 1, single buffered']
    #allocation10 [shape = 's32[1]{0}', space=sflag, size = 0x4, scoped, tag = 'scoped memory for tpu_custom_call.1']
    #allocation11 [shape = 's32[1]{0}', space=sflag, size = 0x4, scoped, tag = 'scoped memory for tpu_custom_call.1']
    #allocation12 [shape = 'u8[8192]{0}', space=vmem, size = 0x2000, scoped, tag = 'input window, operand 2, single buffered']
    #allocation13 [shape = 's32[1]{0}', space=sflag, size = 0x4, scoped, tag = 'scoped memory for tpu_custom_call.1']
    #allocation14 [shape = 'u8[16384]{0}', space=vmem, size = 0x4000, scoped, tag = 'input window, operand 3, single buffered']
    #allocation15 [shape = 'u8[16384]{0}', space=vmem, size = 0x4000, scoped, tag = 'input window, operand 4, single buffered']
    #allocation16 [shape = 's32[1]{0}', space=sflag, size = 0x4, scoped, tag = 'scoped memory for tpu_custom_call.1']
    #allocation17 [shape = 'u8[16384]{0}', space=vmem, size = 0x4000, scoped, tag = 'input window, operand 6, single buffered']
    #allocation18 [shape = 'u8[4096]{0}', space=vmem, size = 0x1000, scoped, tag = 'output window, operand 0, single buffered']
    %22 = vsyncpa [#allocation10], 0
    %23 = vsyncpa [#allocation13], 0
    %24 = vsyncpa [#allocation16], 0
    %25 = vsyncpa [#allocation11], 0
    // Predicated region
    $region2: #{tpu_custom_call.1} parent=1 // pred_check
      _
    $region3: #{tpu_custom_call.1} parent=1 // pred_check_branch
      %27 = sbr.rel (0) target = $region5
    $region4: #{tpu_custom_call.1} parent=1 // pred_region
      %29 = vsyncadd [#allocation10], 0
      %s31 = sshll.u32 %s1, 4
      %s32 = int_to_ptr.hbm [resolvable:$true] %s31
      %s33 = sshll.u32 [#allocation9], 4
      %s34 = int_to_ptr.vmem [resolvable:$true] %s33
      %36 = dma.hbm_to_vmem [thread:$0]  %s32, 16, %s34, [#allocation10]
    $region5: #{tpu_custom_call.1} parent=1 // pred_fallthru
      _
    // Predicated region
    $region6: #{tpu_custom_call.1} parent=1 // pred_check
      _
    $region7: #{tpu_custom_call.1} parent=1 // pred_check_branch
      %38 = sbr.rel (0) target = $region9
    $region8: #{tpu_custom_call.1} parent=1 // pred_region
      %40 = vsyncadd [#allocation13], 0
      %s41 = sshll.u32 %s2, 4
      %s42 = int_to_ptr.hbm [resolvable:$true] %s41
      %s43 = sshll.u32 [#allocation12], 4
      %s44 = int_to_ptr.vmem [resolvable:$true] %s43
      %49 = dma.hbm_to_vmem [thread:$0]  %s42, 256, %s44, [#allocation13], 128, 128, 8
    $region9: #{tpu_custom_call.1} parent=1 // pred_fallthru
      _
    // Predicated region
    $region10: #{tpu_custom_call.1} parent=1 // pred_check
      _
    $region11: #{tpu_custom_call.1} parent=1 // pred_check_branch
      %51 = sbr.rel (0) target = $region13
    $region12: #{tpu_custom_call.1} parent=1 // pred_region
      %53 = vsyncadd [#allocation13], 0
      %s54 = sshll.u32 %s3, 4
      %s55 = int_to_ptr.hbm [resolvable:$true] %s54
      %s56 = sshll.u32 [#allocation14], 4
      %s57 = int_to_ptr.vmem [resolvable:$true] %s56
      %62 = dma.hbm_to_vmem [thread:$0]  %s55, 512, %s57, [#allocation13], 128, 128, 8
    $region13: #{tpu_custom_call.1} parent=1 // pred_fallthru
      _
    // Predicated region
    $region14: #{tpu_custom_call.1} parent=1 // pred_check
      _
    $region15: #{tpu_custom_call.1} parent=1 // pred_check_branch
      %64 = sbr.rel (0) target = $region17
    $region16: #{tpu_custom_call.1} parent=1 // pred_region
      %66 = vsyncadd [#allocation16], 0
      %s67 = sshll.u32 %s4, 4
      %s68 = int_to_ptr.hbm [resolvable:$true] %s67
      %s69 = sshll.u32 [#allocation15], 4
      %s70 = int_to_ptr.vmem [resolvable:$true] %s69
      %75 = dma.hbm_to_vmem [thread:$0]  %s68, 512, %s70, [#allocation16], 128, 128, 8
    $region17: #{tpu_custom_call.1} parent=1 // pred_fallthru
      _
    // Predicated region
    $region18: #{tpu_custom_call.1} parent=1 // pred_check
      _
    $region19: #{tpu_custom_call.1} parent=1 // pred_check_branch
      %77 = sbr.rel (0) target = $region21
    $region20: #{tpu_custom_call.1} parent=1 // pred_region
      _
    $region21: #{tpu_custom_call.1} parent=1 // pred_fallthru
      _
    // Predicated region
    $region22: #{tpu_custom_call.1} parent=1 // pred_check
      _
    $region23: #{tpu_custom_call.1} parent=1 // pred_check_branch
      %79 = sbr.rel (0) target = $region25
    $region24: #{tpu_custom_call.1} parent=1 // pred_region
      %81 = vsyncadd [#allocation16], 0
      %s82 = sshll.u32 %s6, 4
      %s83 = int_to_ptr.hbm [resolvable:$true] %s82
      %s84 = sshll.u32 [#allocation17], 4
      %s85 = int_to_ptr.vmem [resolvable:$true] %s84
      %90 = dma.hbm_to_vmem [thread:$0]  %s83, 512, %s85, [#allocation16], 128, 128, 8
    $region25: #{tpu_custom_call.1} parent=1 // pred_fallthru
      _
    // Predicated region
    $region26: #{tpu_custom_call.1} parent=1 // pred_check
      _
    $region27: #{tpu_custom_call.1} parent=1 // pred_check_branch
      %92 = sbr.rel (0) target = $region29
    $region28: #{tpu_custom_call.1} parent=1 // pred_region
      _
    $region29: #{tpu_custom_call.1} parent=1 // pred_fallthru
      _
    // Predicated region
    $region30: #{tpu_custom_call.1} parent=1 // pred_check
      _
    $region31: #{tpu_custom_call.1} parent=1 // pred_check_branch
      %94 = sbr.rel (0) target = $region33
    $region32: #{tpu_custom_call.1} parent=1 // pred_region
      _
    $region33: #{tpu_custom_call.1} parent=1 // pred_fallthru
      _
    // Predicated region
    $region34: #{tpu_custom_call.1} parent=1 // pred_check
      _
    $region35: #{tpu_custom_call.1} parent=1 // pred_check_branch
      %96 = sbr.rel (0) target = $region37
    $region36: #{tpu_custom_call.1} parent=1 // pred_region
      %98 = dma.done [#allocation10], 16
    $region37: #{tpu_custom_call.1} parent=1 // pred_fallthru
      _
    // Predicated region
    $region38: #{tpu_custom_call.1} parent=1 // pred_check
      _
    $region39: #{tpu_custom_call.1} parent=1 // pred_check_branch
      %100 = sbr.rel (0) target = $region41
    $region40: #{tpu_custom_call.1} parent=1 // pred_region
      %102 = dma.done [#allocation13], 256
    $region41: #{tpu_custom_call.1} parent=1 // pred_fallthru
      _
    // Predicated region
    $region42: #{tpu_custom_call.1} parent=1 // pred_check
      _
    $region43: #{tpu_custom_call.1} parent=1 // pred_check_branch
      %104 = sbr.rel (0) target = $region45
    $region44: #{tpu_custom_call.1} parent=1 // pred_region
      %106 = dma.done [#allocation13], 512
    $region45: #{tpu_custom_call.1} parent=1 // pred_fallthru
      _
    // Predicated region
    $region46: #{tpu_custom_call.1} parent=1 // pred_check
      _
    $region47: #{tpu_custom_call.1} parent=1 // pred_check_branch
      %108 = sbr.rel (0) target = $region49
    $region48: #{tpu_custom_call.1} parent=1 // pred_region
      %110 = dma.done [#allocation16], 512
    $region49: #{tpu_custom_call.1} parent=1 // pred_fallthru
      _
    // Predicated region
    $region50: #{tpu_custom_call.1} parent=1 // pred_check
      _
    $region51: #{tpu_custom_call.1} parent=1 // pred_check_branch
      %112 = sbr.rel (0) target = $region53
    $region52: #{tpu_custom_call.1} parent=1 // pred_region
      %114 = dma.done [#allocation16], 512
    $region53: #{tpu_custom_call.1} parent=1 // pred_fallthru
      _
    %v115 = vld [vmem:[#allocation9] sm:$0x1]
    %vm116 = vcmask 253952
    %117 = vst.msk [vmem:[#allocation2] sm:$0x1] %vm116, %v115
    %v118 = vld [vmem:[#allocation9] sm:$0x1]
    %119 = vst.msk [vmem:[#allocation3] sm:$0x1] %vm116, %v118
    %vm120 = vcmask 261120
    %121 = vst.msk [vmem:[#allocation6] sm:$0xff] %vm120, 0.0
    %s122 = sld [smem:[#allocation8]]
    %p123 = scmp.gt.s32.totalorder %s122, 0
    %s124 = scalar_select %p123, %s122, 0
    %p125 = scmp.lt.s32.totalorder %s124, 15
    %s126 = scalar_select %p125, %s124, 15
    %s127 = scalar_lea.vmem [#allocation12], %s126
    %v128 = vld [vmem:[%s127] sm:$0x1]
    %129 = vst.msk [vmem:[#allocation4] sm:$0x1] %vm116, %v128
    %s130 = sld [smem:[#allocation8 + $0x1]]
    %p131 = scmp.gt.s32.totalorder %s130, 0
    %s132 = scalar_select %p131, %s130, 0
    %p133 = scmp.lt.s32.totalorder %s132, 15
    %s134 = scalar_select %p133, %s132, 15
    %s135 = scalar_lea.vmem [#allocation12], %s134
    %v136 = vld [vmem:[%s135] sm:$0x1]
    %137 = vst.msk [vmem:[#allocation4 + $0x1] sm:$0x1] %vm116, %v136
    %s138 = sld [smem:[#allocation8 + $0x2]]
    %p139 = scmp.gt.s32.totalorder %s138, 0
    %s140 = scalar_select %p139, %s138, 0
    %p141 = scmp.lt.s32.totalorder %s140, 15
    %s142 = scalar_select %p141, %s140, 15
    %s143 = scalar_lea.vmem [#allocation12], %s142
    %v144 = vld [vmem:[%s143] sm:$0x1]
    %145 = vst.msk [vmem:[#allocation4 + $0x2] sm:$0x1] %vm116, %v144
    %s146 = sld [smem:[#allocation8 + $0x3]]
    %p147 = scmp.gt.s32.totalorder %s146, 0
    %s148 = scalar_select %p147, %s146, 0
    %p149 = scmp.lt.s32.totalorder %s148, 15
    %s150 = scalar_select %p149, %s148, 15
    %s151 = scalar_lea.vmem [#allocation12], %s150
    %v152 = vld [vmem:[%s151] sm:$0x1]
    %153 = vst.msk [vmem:[#allocation4 + $0x3] sm:$0x1] %vm116, %v152
    %s154 = sld [smem:[#allocation8 + $0x4]]
    %p155 = scmp.gt.s32.totalorder %s154, 0
    %s156 = scalar_select %p155, %s154, 0
    %p157 = scmp.lt.s32.totalorder %s156, 15
    %s158 = scalar_select %p157, %s156, 15
    %s159 = scalar_lea.vmem [#allocation12], %s158
    %v160 = vld [vmem:[%s159] sm:$0x1]
    %161 = vst.msk [vmem:[#allocation4 + $0x4] sm:$0x1] %vm116, %v160
    %s162 = sld [smem:[#allocation8 + $0x5]]
    %p163 = scmp.gt.s32.totalorder %s162, 0
    %s164 = scalar_select %p163, %s162, 0
    %p165 = scmp.lt.s32.totalorder %s164, 15
    %s166 = scalar_select %p165, %s164, 15
    %s167 = scalar_lea.vmem [#allocation12], %s166
    %v168 = vld [vmem:[%s167] sm:$0x1]
    %169 = vst.msk [vmem:[#allocation4 + $0x5] sm:$0x1] %vm116, %v168
    %s170 = sld [smem:[#allocation8 + $0x6]]
    %p171 = scmp.gt.s32.totalorder %s170, 0
    %s172 = scalar_select %p171, %s170, 0
    %p173 = scmp.lt.s32.totalorder %s172, 15
    %s174 = scalar_select %p173, %s172, 15
    %s175 = scalar_lea.vmem [#allocation12], %s174
    %v176 = vld [vmem:[%s175] sm:$0x1]
    %177 = vst.msk [vmem:[#allocation4 + $0x6] sm:$0x1] %vm116, %v176
    %s178 = sld [smem:[#allocation8 + $0x7]]
    %p179 = scmp.gt.s32.totalorder %s178, 0
    %s180 = scalar_select %p179, %s178, 0
    %p181 = scmp.lt.s32.totalorder %s180, 15
    %s182 = scalar_select %p181, %s180, 15
    %s183 = scalar_lea.vmem [#allocation12], %s182
    %v184 = vld [vmem:[%s183] sm:$0x1]
    %185 = vst.msk [vmem:[#allocation4 + $0x7] sm:$0x1] %vm116, %v184
    %v186 = vld [vmem:[#allocation4] sm:$0xff]
    %v187 = vld [vmem:[#allocation14] sm:$0xff]
    %v188 = vld [vmem:[#allocation14 + $0x8] sm:$0xff]
    %v189 = vld [vmem:[#allocation14 + $0x10] sm:$0xff]
    %v190 = vld [vmem:[#allocation14 + $0x18] sm:$0xff]
    %v191 = vld [vmem:[%s5] sm:$0x1]
    %v193 = vperm.slane %v191, 0
    %v196 = vsel %vm120, %v186, 0
    %198 = vmatpush.msra.mxu0 0.0
    %199 = vmatpush.msra.mxu0 0.0
    %200 = vmatpush.msra.mxu0 0.0
    %201 = vmatpush.msra.mxu0 0.0
    %202 = vmatpush.msra.mxu0 0.0
    %203 = vmatpush.msra.mxu0 0.0
    %204 = vmatpush.msra.mxu0 0.0
    %205 = vmatpush.msra.mxu0 0.0
    %206 = vmatpush.msra.mxu0 0.0
    %207 = vmatpush.msra.mxu0 0.0
    %208 = vmatpush.msra.mxu0 0.0
    %209 = vmatpush.msra.mxu0 0.0
    %210 = vmatpush.msra.mxu0 %v190
    %211 = vmatpush.msra.mxu0 %v189
    %212 = vmatpush.msra.mxu0 %v188
    %213 = vmatpush.msra.mxu0 %v187
    %214 = vmatmul.f32.gmra.mxu0 %v196
    %v215 = vpop.f32.mrf.mxu0
    %v216 = vadd.f32 %v193, %v215
    %217 = vdwg.mxu0
    %218 = vst [vmem:[#allocation5] sm:$0xff] %v216
    %s219 = sld [smem:[#allocation8]]
    %p220 = scmp.eq.s32.totalorder %s219, 1
    %s221 = scalar_select %p220, 0, 8
    %s222 = scalar_select %p220, %s221, 8
    %p223 = scmp.gt.s32.totalorder %s222, 0
    // Predicated region
    $region54: #{tpu_custom_call.1} parent=1 // pred_check
      %p224 = pneg %p223
    $region55: #{tpu_custom_call.1} parent=1 // pred_check_branch
      %226 = sbr.rel (%p224) target = $region57
    $region56: #{tpu_custom_call.1} parent=1 // pred_region
      %v227 = vld [vmem:[#allocation5] sm:$0x1]
      %v228 = vld [vmem:[#allocation2] sm:$0x1]
      %v229 = vld [vmem:[#allocation15] sm:$0xff]
      %v230 = vld [vmem:[#allocation15 + $0x8] sm:$0xff]
      %v231 = vld [vmem:[#allocation15 + $0x10] sm:$0xff]
      %v232 = vld [vmem:[#allocation15 + $0x18] sm:$0xff]
      %v234 = vsel %vm120, %v228, 0
      %236 = vmatpush.msra.mxu0 0.0
      %237 = vmatpush.msra.mxu0 0.0
      %238 = vmatpush.msra.mxu0 0.0
      %239 = vmatpush.msra.mxu0 0.0
      %240 = vmatpush.msra.mxu0 0.0
      %241 = vmatpush.msra.mxu0 0.0
      %242 = vmatpush.msra.mxu0 0.0
      %243 = vmatpush.msra.mxu0 0.0
      %244 = vmatpush.msra.mxu0 0.0
      %245 = vmatpush.msra.mxu0 0.0
      %246 = vmatpush.msra.mxu0 0.0
      %247 = vmatpush.msra.mxu0 0.0
      %248 = vmatpush.msra.mxu0 %v232
      %249 = vmatpush.msra.mxu0 %v231
      %250 = vmatpush.msra.mxu0 %v230
      %251 = vmatpush.msra.mxu0 %v229
      %252 = vmatmul.f32.gmra.mxu0 %v234
      %v253 = vpop.f32.mrf.mxu0
      %v254 = vadd.f32 0.0, %v253
      %255 = vdwg.mxu0
      %v256 = vadd.f32 %v227, %v254
      %v257 = vxor.u32 %v256, 2147483648
      %v258 = vmul.f32 %v257, 1.442695
      %v259 = vpow.pop %v258
      %v260 = vadd.f32 %v259, 1.0
      %v261 = vrcp.pop %v260
      %v262 = vmul.f32 %v260, %v261
      %v263 = vsub.f32 1.0, %v262
      %v264 = vmul.f32 %v261, %v263
      %v265 = vadd.f32 %v261, %v264
      %vm266 = vweird.f32 %v260
      %vm267 = vweird.f32 %v261
      %vm268 = vmor %vm266, %vm267
      %v269 = vsel %vm268, %v261, %v265
      %v270 = vand.u32 2147483647, %v260
      %vm271 = vcmp.eq.f32.partialorder %v270, 8.507059e+37
      %v272 = vand.u32 %v260, 2147483648
      %v273 = vor.u32 1.1754944e-38, %v272
      %v274 = vsel %vm271, %v273, %v269
      %v275 = vmul.f32 1.0, %v274
      %v276 = vtanh.pop %v256
      %v277 = vld [vmem:[#allocation3] sm:$0x1]
      %v279 = vperm.slane %v277, 0
      %280 = vrot.lane.b32.xlu0 %v279, 32
      %v281 = vpop.permute.xlu0 %280
      %v283 = vmul.f32 %v275, %v281
      %285 = vrot.lane.b32.xlu0 %v276, 64
      %v286 = vpop.permute.xlu0 %285
      %v288 = vmul.f32 %v275, %v286
      %290 = vrot.lane.b32.xlu0 %v288, 32
      %v291 = vpop.permute.xlu0 %290
      %v293 = vadd.f32 %v283, %v291
      %v294 = vtanh.pop %v293
      %296 = vrot.lane.b32.xlu0 %v294, 64
      %v297 = vpop.permute.xlu0 %296
      %v299 = vmul.f32 %v275, %v297
      %301 = vrot.lane.b32.xlu0 %v293, 96
      %v302 = vpop.permute.xlu0 %301
      %304 = vst.msk [vmem:[#allocation3] sm:$0x1] %vm116, %v302
      %306 = vrot.lane.b32.xlu0 %v299, 32
      %v307 = vpop.permute.xlu0 %306
      %309 = vst.msk [vmem:[#allocation2] sm:$0x1] %vm116, %v307
      %310 = vst.msk [vmem:[#allocation6] sm:$0x1] %vm116, %v307
    $region57: #{tpu_custom_call.1} parent=1 // pred_fallthru
      _
    %s311 = sld [smem:[#allocation8 + $0x1]]
    %p312 = scmp.eq.s32.totalorder %s311, 1
    %s313 = scalar_select %p312, 1, 8
    %p314 = scmp.lt.s32.totalorder %s222, %s313
    %s315 = scalar_select %p314, %s222, %s313
    %p316 = scmp.gt.s32.totalorder %s315, 1
    // Predicated region
    $region58: #{tpu_custom_call.1} parent=1 // pred_check
      %p317 = pneg %p316
    $region59: #{tpu_custom_call.1} parent=1 // pred_check_branch
      %319 = sbr.rel (%p317) target = $region61
    $region60: #{tpu_custom_call.1} parent=1 // pred_region
      %v320 = vld [vmem:[#allocation5 + $0x1] sm:$0x1]
      %v321 = vld [vmem:[#allocation2] sm:$0x1]
      %v322 = vld [vmem:[#allocation15] sm:$0xff]
      %v323 = vld [vmem:[#allocation15 + $0x8] sm:$0xff]
      %v324 = vld [vmem:[#allocation15 + $0x10] sm:$0xff]
      %v325 = vld [vmem:[#allocation15 + $0x18] sm:$0xff]
      %v327 = vsel %vm120, %v321, 0
      %329 = vmatpush.msra.mxu0 0.0
      %330 = vmatpush.msra.mxu0 0.0
      %331 = vmatpush.msra.mxu0 0.0
      %332 = vmatpush.msra.mxu0 0.0
      %333 = vmatpush.msra.mxu0 0.0
      %334 = vmatpush.msra.mxu0 0.0
      %335 = vmatpush.msra.mxu0 0.0
      %336 = vmatpush.msra.mxu0 0.0
      %337 = vmatpush.msra.mxu0 0.0
      %338 = vmatpush.msra.mxu0 0.0
      %339 = vmatpush.msra.mxu0 0.0
      %340 = vmatpush.msra.mxu0 0.0
      %341 = vmatpush.msra.mxu0 %v325
      %342 = vmatpush.msra.mxu0 %v324
      %343 = vmatpush.msra.mxu0 %v323
      %344 = vmatpush.msra.mxu0 %v322
      %345 = vmatmul.f32.gmra.mxu0 %v327
      %v346 = vpop.f32.mrf.mxu0
      %v347 = vadd.f32 0.0, %v346
      %348 = vdwg.mxu0
      %v349 = vadd.f32 %v320, %v347
      %v350 = vxor.u32 %v349, 2147483648
      %v351 = vmul.f32 %v350, 1.442695
      %v352 = vpow.pop %v351
      %v353 = vadd.f32 %v352, 1.0
      %v354 = vrcp.pop %v353
      %v355 = vmul.f32 %v353, %v354
      %v356 = vsub.f32 1.0, %v355
      %v357 = vmul.f32 %v354, %v356
      %v358 = vadd.f32 %v354, %v357
      %vm359 = vweird.f32 %v353
      %vm360 = vweird.f32 %v354
      %vm361 = vmor %vm359, %vm360
      %v362 = vsel %vm361, %v354, %v358
      %v363 = vand.u32 2147483647, %v353
      %vm364 = vcmp.eq.f32.partialorder %v363, 8.507059e+37
      %v365 = vand.u32 %v353, 2147483648
      %v366 = vor.u32 1.1754944e-38, %v365
      %v367 = vsel %vm364, %v366, %v362
      %v368 = vmul.f32 1.0, %v367
      %v369 = vtanh.pop %v349
      %v370 = vld [vmem:[#allocation3] sm:$0x1]
      %v372 = vperm.slane %v370, 0
      %373 = vrot.lane.b32.xlu0 %v372, 32
      %v374 = vpop.permute.xlu0 %373
      %v376 = vmul.f32 %v368, %v374
      %378 = vrot.lane.b32.xlu0 %v369, 64
      %v379 = vpop.permute.xlu0 %378
      %v381 = vmul.f32 %v368, %v379
      %383 = vrot.lane.b32.xlu0 %v381, 32
      %v384 = vpop.permute.xlu0 %383
      %v386 = vadd.f32 %v376, %v384
      %v387 = vtanh.pop %v386
      %389 = vrot.lane.b32.xlu0 %v387, 64
      %v390 = vpop.permute.xlu0 %389
      %v392 = vmul.f32 %v368, %v390
      %394 = vrot.lane.b32.xlu0 %v386, 96
      %v395 = vpop.permute.xlu0 %394
      %397 = vst.msk [vmem:[#allocation3] sm:$0x1] %vm116, %v395
      %399 = vrot.lane.b32.xlu0 %v392, 32
      %v400 = vpop.permute.xlu0 %399
      %402 = vst.msk [vmem:[#allocation2] sm:$0x1] %vm116, %v400
      %403 = vst.msk [vmem:[#allocation6 + $0x1] sm:$0x1] %vm116, %v400
    $region61: #{tpu_custom_call.1} parent=1 // pred_fallthru
      _
    %s404 = sld [smem:[#allocation8 + $0x2]]
    %p405 = scmp.eq.s32.totalorder %s404, 1
    %s406 = scalar_select %p405, 2, 8
    %p407 = scmp.lt.s32.totalorder %s315, %s406
    %s408 = scalar_select %p407, %s315, %s406
    %p409 = scmp.gt.s32.totalorder %s408, 2
    // Predicated region
    $region62: #{tpu_custom_call.1} parent=1 // pred_check
      %p410 = pneg %p409
    $region63: #{tpu_custom_call.1} parent=1 // pred_check_branch
      %412 = sbr.rel (%p410) target = $region65
    $region64: #{tpu_custom_call.1} parent=1 // pred_region
      %v413 = vld [vmem:[#allocation5 + $0x2] sm:$0x1]
      %v414 = vld [vmem:[#allocation2] sm:$0x1]
      %v415 = vld [vmem:[#allocation15] sm:$0xff]
      %v416 = vld [vmem:[#allocation15 + $0x8] sm:$0xff]
      %v417 = vld [vmem:[#allocation15 + $0x10] sm:$0xff]
      %v418 = vld [vmem:[#allocation15 + $0x18] sm:$0xff]
      %v420 = vsel %vm120, %v414, 0
      %422 = vmatpush.msra.mxu0 0.0
      %423 = vmatpush.msra.mxu0 0.0
      %424 = vmatpush.msra.mxu0 0.0
      %425 = vmatpush.msra.mxu0 0.0
      %426 = vmatpush.msra.mxu0 0.0
      %427 = vmatpush.msra.mxu0 0.0
      %428 = vmatpush.msra.mxu0 0.0
      %429 = vmatpush.msra.mxu0 0.0
      %430 = vmatpush.msra.mxu0 0.0
      %431 = vmatpush.msra.mxu0 0.0
      %432 = vmatpush.msra.mxu0 0.0
      %433 = vmatpush.msra.mxu0 0.0
      %434 = vmatpush.msra.mxu0 %v418
      %435 = vmatpush.msra.mxu0 %v417
      %436 = vmatpush.msra.mxu0 %v416
      %437 = vmatpush.msra.mxu0 %v415
      %438 = vmatmul.f32.gmra.mxu0 %v420
      %v439 = vpop.f32.mrf.mxu0
      %v440 = vadd.f32 0.0, %v439
      %441 = vdwg.mxu0
      %v442 = vadd.f32 %v413, %v440
      %v443 = vxor.u32 %v442, 2147483648
      %v444 = vmul.f32 %v443, 1.442695
      %v445 = vpow.pop %v444
      %v446 = vadd.f32 %v445, 1.0
      %v447 = vrcp.pop %v446
      %v448 = vmul.f32 %v446, %v447
      %v449 = vsub.f32 1.0, %v448
      %v450 = vmul.f32 %v447, %v449
      %v451 = vadd.f32 %v447, %v450
      %vm452 = vweird.f32 %v446
      %vm453 = vweird.f32 %v447
      %vm454 = vmor %vm452, %vm453
      %v455 = vsel %vm454, %v447, %v451
      %v456 = vand.u32 2147483647, %v446
      %vm457 = vcmp.eq.f32.partialorder %v456, 8.507059e+37
      %v458 = vand.u32 %v446, 2147483648
      %v459 = vor.u32 1.1754944e-38, %v458
      %v460 = vsel %vm457, %v459, %v455
      %v461 = vmul.f32 1.0, %v460
      %v462 = vtanh.pop %v442
      %v463 = vld [vmem:[#allocation3] sm:$0x1]
      %v465 = vperm.slane %v463, 0
      %466 = vrot.lane.b32.xlu0 %v465, 32
      %v467 = vpop.permute.xlu0 %466
      %v469 = vmul.f32 %v461, %v467
      %471 = vrot.lane.b32.xlu0 %v462, 64
      %v472 = vpop.permute.xlu0 %471
      %v474 = vmul.f32 %v461, %v472
      %476 = vrot.lane.b32.xlu0 %v474, 32
      %v477 = vpop.permute.xlu0 %476
      %v479 = vadd.f32 %v469, %v477
      %v480 = vtanh.pop %v479
      %482 = vrot.lane.b32.xlu0 %v480, 64
      %v483 = vpop.permute.xlu0 %482
      %v485 = vmul.f32 %v461, %v483
      %487 = vrot.lane.b32.xlu0 %v479, 96
      %v488 = vpop.permute.xlu0 %487
      %490 = vst.msk [vmem:[#allocation3] sm:$0x1] %vm116, %v488
      %492 = vrot.lane.b32.xlu0 %v485, 32
      %v493 = vpop.permute.xlu0 %492
      %495 = vst.msk [vmem:[#allocation2] sm:$0x1] %vm116, %v493
      %496 = vst.msk [vmem:[#allocation6 + $0x2] sm:$0x1] %vm116, %v493
    $region65: #{tpu_custom_call.1} parent=1 // pred_fallthru
      _
    %s497 = sld [smem:[#allocation8 + $0x3]]
    %p498 = scmp.eq.s32.totalorder %s497, 1
    %s499 = scalar_select %p498, 3, 8
    %p500 = scmp.lt.s32.totalorder %s408, %s499
    %s501 = scalar_select %p500, %s408, %s499
    %p502 = scmp.gt.s32.totalorder %s501, 3
    // Predicated region
    $region66: #{tpu_custom_call.1} parent=1 // pred_check
      %p503 = pneg %p502
    $region67: #{tpu_custom_call.1} parent=1 // pred_check_branch
      %505 = sbr.rel (%p503) target = $region69
    $region68: #{tpu_custom_call.1} parent=1 // pred_region
      %v506 = vld [vmem:[#allocation5 + $0x3] sm:$0x1]
      %v507 = vld [vmem:[#allocation2] sm:$0x1]
      %v508 = vld [vmem:[#allocation15] sm:$0xff]
      %v509 = vld [vmem:[#allocation15 + $0x8] sm:$0xff]
      %v510 = vld [vmem:[#allocation15 + $0x10] sm:$0xff]
      %v511 = vld [vmem:[#allocation15 + $0x18] sm:$0xff]
      %v513 = vsel %vm120, %v507, 0
      %515 = vmatpush.msra.mxu0 0.0
      %516 = vmatpush.msra.mxu0 0.0
      %517 = vmatpush.msra.mxu0 0.0
      %518 = vmatpush.msra.mxu0 0.0
      %519 = vmatpush.msra.mxu0 0.0
      %520 = vmatpush.msra.mxu0 0.0
      %521 = vmatpush.msra.mxu0 0.0
      %522 = vmatpush.msra.mxu0 0.0
      %523 = vmatpush.msra.mxu0 0.0
      %524 = vmatpush.msra.mxu0 0.0
      %525 = vmatpush.msra.mxu0 0.0
      %526 = vmatpush.msra.mxu0 0.0
      %527 = vmatpush.msra.mxu0 %v511
      %528 = vmatpush.msra.mxu0 %v510
      %529 = vmatpush.msra.mxu0 %v509
      %530 = vmatpush.msra.mxu0 %v508
      %531 = vmatmul.f32.gmra.mxu0 %v513
      %v532 = vpop.f32.mrf.mxu0
      %v533 = vadd.f32 0.0, %v532
      %534 = vdwg.mxu0
      %v535 = vadd.f32 %v506, %v533
      %v536 = vxor.u32 %v535, 2147483648
      %v537 = vmul.f32 %v536, 1.442695
      %v538 = vpow.pop %v537
      %v539 = vadd.f32 %v538, 1.0
      %v540 = vrcp.pop %v539
      %v541 = vmul.f32 %v539, %v540
      %v542 = vsub.f32 1.0, %v541
      %v543 = vmul.f32 %v540, %v542
      %v544 = vadd.f32 %v540, %v543
      %vm545 = vweird.f32 %v539
      %vm546 = vweird.f32 %v540
      %vm547 = vmor %vm545, %vm546
      %v548 = vsel %vm547, %v540, %v544
      %v549 = vand.u32 2147483647, %v539
      %vm550 = vcmp.eq.f32.partialorder %v549, 8.507059e+37
      %v551 = vand.u32 %v539, 2147483648
      %v552 = vor.u32 1.1754944e-38, %v551
      %v553 = vsel %vm550, %v552, %v548
      %v554 = vmul.f32 1.0, %v553
      %v555 = vtanh.pop %v535
      %v556 = vld [vmem:[#allocation3] sm:$0x1]
      %v558 = vperm.slane %v556, 0
      %559 = vrot.lane.b32.xlu0 %v558, 32
      %v560 = vpop.permute.xlu0 %559
      %v562 = vmul.f32 %v554, %v560
      %564 = vrot.lane.b32.xlu0 %v555, 64
      %v565 = vpop.permute.xlu0 %564
      %v567 = vmul.f32 %v554, %v565
      %569 = vrot.lane.b32.xlu0 %v567, 32
      %v570 = vpop.permute.xlu0 %569
      %v572 = vadd.f32 %v562, %v570
      %v573 = vtanh.pop %v572
      %575 = vrot.lane.b32.xlu0 %v573, 64
      %v576 = vpop.permute.xlu0 %575
      %v578 = vmul.f32 %v554, %v576
      %580 = vrot.lane.b32.xlu0 %v572, 96
      %v581 = vpop.permute.xlu0 %580
      %583 = vst.msk [vmem:[#allocation3] sm:$0x1] %vm116, %v581
      %585 = vrot.lane.b32.xlu0 %v578, 32
      %v586 = vpop.permute.xlu0 %585
      %588 = vst.msk [vmem:[#allocation2] sm:$0x1] %vm116, %v586
      %589 = vst.msk [vmem:[#allocation6 + $0x3] sm:$0x1] %vm116, %v586
    $region69: #{tpu_custom_call.1} parent=1 // pred_fallthru
      _
    %s590 = sld [smem:[#allocation8 + $0x4]]
    %p591 = scmp.eq.s32.totalorder %s590, 1
    %s592 = scalar_select %p591, 4, 8
    %p593 = scmp.lt.s32.totalorder %s501, %s592
    %s594 = scalar_select %p593, %s501, %s592
    %p595 = scmp.gt.s32.totalorder %s594, 4
    // Predicated region
    $region70: #{tpu_custom_call.1} parent=1 // pred_check
      %p596 = pneg %p595
    $region71: #{tpu_custom_call.1} parent=1 // pred_check_branch
      %598 = sbr.rel (%p596) target = $region73
    $region72: #{tpu_custom_call.1} parent=1 // pred_region
      %v599 = vld [vmem:[#allocation5 + $0x4] sm:$0x1]
      %v600 = vld [vmem:[#allocation2] sm:$0x1]
      %v601 = vld [vmem:[#allocation15] sm:$0xff]
      %v602 = vld [vmem:[#allocation15 + $0x8] sm:$0xff]
      %v603 = vld [vmem:[#allocation15 + $0x10] sm:$0xff]
      %v604 = vld [vmem:[#allocation15 + $0x18] sm:$0xff]
      %v606 = vsel %vm120, %v600, 0
      %608 = vmatpush.msra.mxu0 0.0
      %609 = vmatpush.msra.mxu0 0.0
      %610 = vmatpush.msra.mxu0 0.0
      %611 = vmatpush.msra.mxu0 0.0
      %612 = vmatpush.msra.mxu0 0.0
      %613 = vmatpush.msra.mxu0 0.0
      %614 = vmatpush.msra.mxu0 0.0
      %615 = vmatpush.msra.mxu0 0.0
      %616 = vmatpush.msra.mxu0 0.0
      %617 = vmatpush.msra.mxu0 0.0
      %618 = vmatpush.msra.mxu0 0.0
      %619 = vmatpush.msra.mxu0 0.0
      %620 = vmatpush.msra.mxu0 %v604
      %621 = vmatpush.msra.mxu0 %v603
      %622 = vmatpush.msra.mxu0 %v602
      %623 = vmatpush.msra.mxu0 %v601
      %624 = vmatmul.f32.gmra.mxu0 %v606
      %v625 = vpop.f32.mrf.mxu0
      %v626 = vadd.f32 0.0, %v625
      %627 = vdwg.mxu0
      %v628 = vadd.f32 %v599, %v626
      %v629 = vxor.u32 %v628, 2147483648
      %v630 = vmul.f32 %v629, 1.442695
      %v631 = vpow.pop %v630
      %v632 = vadd.f32 %v631, 1.0
      %v633 = vrcp.pop %v632
      %v634 = vmul.f32 %v632, %v633
      %v635 = vsub.f32 1.0, %v634
      %v636 = vmul.f32 %v633, %v635
      %v637 = vadd.f32 %v633, %v636
      %vm638 = vweird.f32 %v632
      %vm639 = vweird.f32 %v633
      %vm640 = vmor %vm638, %vm639
      %v641 = vsel %vm640, %v633, %v637
      %v642 = vand.u32 2147483647, %v632
      %vm643 = vcmp.eq.f32.partialorder %v642, 8.507059e+37
      %v644 = vand.u32 %v632, 2147483648
      %v645 = vor.u32 1.1754944e-38, %v644
      %v646 = vsel %vm643, %v645, %v641
      %v647 = vmul.f32 1.0, %v646
      %v648 = vtanh.pop %v628
      %v649 = vld [vmem:[#allocation3] sm:$0x1]
      %v651 = vperm.slane %v649, 0
      %652 = vrot.lane.b32.xlu0 %v651, 32
      %v653 = vpop.permute.xlu0 %652
      %v655 = vmul.f32 %v647, %v653
      %657 = vrot.lane.b32.xlu0 %v648, 64
      %v658 = vpop.permute.xlu0 %657
      %v660 = vmul.f32 %v647, %v658
      %662 = vrot.lane.b32.xlu0 %v660, 32
      %v663 = vpop.permute.xlu0 %662
      %v665 = vadd.f32 %v655, %v663
      %v666 = vtanh.pop %v665
      %668 = vrot.lane.b32.xlu0 %v666, 64
      %v669 = vpop.permute.xlu0 %668
      %v671 = vmul.f32 %v647, %v669
      %673 = vrot.lane.b32.xlu0 %v665, 96
      %v674 = vpop.permute.xlu0 %673
      %676 = vst.msk [vmem:[#allocation3] sm:$0x1] %vm116, %v674
      %678 = vrot.lane.b32.xlu0 %v671, 32
      %v679 = vpop.permute.xlu0 %678
      %681 = vst.msk [vmem:[#allocation2] sm:$0x1] %vm116, %v679
      %682 = vst.msk [vmem:[#allocation6 + $0x4] sm:$0x1] %vm116, %v679
    $region73: #{tpu_custom_call.1} parent=1 // pred_fallthru
      _
    %s683 = sld [smem:[#allocation8 + $0x5]]
    %p684 = scmp.eq.s32.totalorder %s683, 1
    %s685 = scalar_select %p684, 5, 8
    %p686 = scmp.lt.s32.totalorder %s594, %s685
    %s687 = scalar_select %p686, %s594, %s685
    %p688 = scmp.gt.s32.totalorder %s687, 5
    // Predicated region
    $region74: #{tpu_custom_call.1} parent=1 // pred_check
      %p689 = pneg %p688
    $region75: #{tpu_custom_call.1} parent=1 // pred_check_branch
      %691 = sbr.rel (%p689) target = $region77
    $region76: #{tpu_custom_call.1} parent=1 // pred_region
      %v692 = vld [vmem:[#allocation5 + $0x5] sm:$0x1]
      %v693 = vld [vmem:[#allocation2] sm:$0x1]
      %v694 = vld [vmem:[#allocation15] sm:$0xff]
      %v695 = vld [vmem:[#allocation15 + $0x8] sm:$0xff]
      %v696 = vld [vmem:[#allocation15 + $0x10] sm:$0xff]
      %v697 = vld [vmem:[#allocation15 + $0x18] sm:$0xff]
      %v699 = vsel %vm120, %v693, 0
      %701 = vmatpush.msra.mxu0 0.0
      %702 = vmatpush.msra.mxu0 0.0
      %703 = vmatpush.msra.mxu0 0.0
      %704 = vmatpush.msra.mxu0 0.0
      %705 = vmatpush.msra.mxu0 0.0
      %706 = vmatpush.msra.mxu0 0.0
      %707 = vmatpush.msra.mxu0 0.0
      %708 = vmatpush.msra.mxu0 0.0
      %709 = vmatpush.msra.mxu0 0.0
      %710 = vmatpush.msra.mxu0 0.0
      %711 = vmatpush.msra.mxu0 0.0
      %712 = vmatpush.msra.mxu0 0.0
      %713 = vmatpush.msra.mxu0 %v697
      %714 = vmatpush.msra.mxu0 %v696
      %715 = vmatpush.msra.mxu0 %v695
      %716 = vmatpush.msra.mxu0 %v694
      %717 = vmatmul.f32.gmra.mxu0 %v699
      %v718 = vpop.f32.mrf.mxu0
      %v719 = vadd.f32 0.0, %v718
      %720 = vdwg.mxu0
      %v721 = vadd.f32 %v692, %v719
      %v722 = vxor.u32 %v721, 2147483648
      %v723 = vmul.f32 %v722, 1.442695
      %v724 = vpow.pop %v723
      %v725 = vadd.f32 %v724, 1.0
      %v726 = vrcp.pop %v725
      %v727 = vmul.f32 %v725, %v726
      %v728 = vsub.f32 1.0, %v727
      %v729 = vmul.f32 %v726, %v728
      %v730 = vadd.f32 %v726, %v729
      %vm731 = vweird.f32 %v725
      %vm732 = vweird.f32 %v726
      %vm733 = vmor %vm731, %vm732
      %v734 = vsel %vm733, %v726, %v730
      %v735 = vand.u32 2147483647, %v725
      %vm736 = vcmp.eq.f32.partialorder %v735, 8.507059e+37
      %v737 = vand.u32 %v725, 2147483648
      %v738 = vor.u32 1.1754944e-38, %v737
      %v739 = vsel %vm736, %v738, %v734
      %v740 = vmul.f32 1.0, %v739
      %v741 = vtanh.pop %v721
      %v742 = vld [vmem:[#allocation3] sm:$0x1]
      %v744 = vperm.slane %v742, 0
      %745 = vrot.lane.b32.xlu0 %v744, 32
      %v746 = vpop.permute.xlu0 %745
      %v748 = vmul.f32 %v740, %v746
      %750 = vrot.lane.b32.xlu0 %v741, 64
      %v751 = vpop.permute.xlu0 %750
      %v753 = vmul.f32 %v740, %v751
      %755 = vrot.lane.b32.xlu0 %v753, 32
      %v756 = vpop.permute.xlu0 %755
      %v758 = vadd.f32 %v748, %v756
      %v759 = vtanh.pop %v758
      %761 = vrot.lane.b32.xlu0 %v759, 64
      %v762 = vpop.permute.xlu0 %761
      %v764 = vmul.f32 %v740, %v762
      %766 = vrot.lane.b32.xlu0 %v758, 96
      %v767 = vpop.permute.xlu0 %766
      %769 = vst.msk [vmem:[#allocation3] sm:$0x1] %vm116, %v767
      %771 = vrot.lane.b32.xlu0 %v764, 32
      %v772 = vpop.permute.xlu0 %771
      %774 = vst.msk [vmem:[#allocation2] sm:$0x1] %vm116, %v772
      %775 = vst.msk [vmem:[#allocation6 + $0x5] sm:$0x1] %vm116, %v772
    $region77: #{tpu_custom_call.1} parent=1 // pred_fallthru
      _
    %s776 = sld [smem:[#allocation8 + $0x6]]
    %p777 = scmp.eq.s32.totalorder %s776, 1
    %s778 = scalar_select %p777, 6, 8
    %p779 = scmp.lt.s32.totalorder %s687, %s778
    %s780 = scalar_select %p779, %s687, %s778
    %p781 = scmp.gt.s32.totalorder %s780, 6
    // Predicated region
    $region78: #{tpu_custom_call.1} parent=1 // pred_check
      %p782 = pneg %p781
    $region79: #{tpu_custom_call.1} parent=1 // pred_check_branch
      %784 = sbr.rel (%p782) target = $region81
    $region80: #{tpu_custom_call.1} parent=1 // pred_region
      %v785 = vld [vmem:[#allocation5 + $0x6] sm:$0x1]
      %v786 = vld [vmem:[#allocation2] sm:$0x1]
      %v787 = vld [vmem:[#allocation15] sm:$0xff]
      %v788 = vld [vmem:[#allocation15 + $0x8] sm:$0xff]
      %v789 = vld [vmem:[#allocation15 + $0x10] sm:$0xff]
      %v790 = vld [vmem:[#allocation15 + $0x18] sm:$0xff]
      %v792 = vsel %vm120, %v786, 0
      %794 = vmatpush.msra.mxu0 0.0
      %795 = vmatpush.msra.mxu0 0.0
      %796 = vmatpush.msra.mxu0 0.0
      %797 = vmatpush.msra.mxu0 0.0
      %798 = vmatpush.msra.mxu0 0.0
      %799 = vmatpush.msra.mxu0 0.0
      %800 = vmatpush.msra.mxu0 0.0
      %801 = vmatpush.msra.mxu0 0.0
      %802 = vmatpush.msra.mxu0 0.0
      %803 = vmatpush.msra.mxu0 0.0
      %804 = vmatpush.msra.mxu0 0.0
      %805 = vmatpush.msra.mxu0 0.0
      %806 = vmatpush.msra.mxu0 %v790
      %807 = vmatpush.msra.mxu0 %v789
      %808 = vmatpush.msra.mxu0 %v788
      %809 = vmatpush.msra.mxu0 %v787
      %810 = vmatmul.f32.gmra.mxu0 %v792
      %v811 = vpop.f32.mrf.mxu0
      %v812 = vadd.f32 0.0, %v811
      %813 = vdwg.mxu0
      %v814 = vadd.f32 %v785, %v812
      %v815 = vxor.u32 %v814, 2147483648
      %v816 = vmul.f32 %v815, 1.442695
      %v817 = vpow.pop %v816
      %v818 = vadd.f32 %v817, 1.0
      %v819 = vrcp.pop %v818
      %v820 = vmul.f32 %v818, %v819
      %v821 = vsub.f32 1.0, %v820
      %v822 = vmul.f32 %v819, %v821
      %v823 = vadd.f32 %v819, %v822
      %vm824 = vweird.f32 %v818
      %vm825 = vweird.f32 %v819
      %vm826 = vmor %vm824, %vm825
      %v827 = vsel %vm826, %v819, %v823
      %v828 = vand.u32 2147483647, %v818
      %vm829 = vcmp.eq.f32.partialorder %v828, 8.507059e+37
      %v830 = vand.u32 %v818, 2147483648
      %v831 = vor.u32 1.1754944e-38, %v830
      %v832 = vsel %vm829, %v831, %v827
      %v833 = vmul.f32 1.0, %v832
      %v834 = vtanh.pop %v814
      %v835 = vld [vmem:[#allocation3] sm:$0x1]
      %v837 = vperm.slane %v835, 0
      %838 = vrot.lane.b32.xlu0 %v837, 32
      %v839 = vpop.permute.xlu0 %838
      %v841 = vmul.f32 %v833, %v839
      %843 = vrot.lane.b32.xlu0 %v834, 64
      %v844 = vpop.permute.xlu0 %843
      %v846 = vmul.f32 %v833, %v844
      %848 = vrot.lane.b32.xlu0 %v846, 32
      %v849 = vpop.permute.xlu0 %848
      %v851 = vadd.f32 %v841, %v849
      %v852 = vtanh.pop %v851
      %854 = vrot.lane.b32.xlu0 %v852, 64
      %v855 = vpop.permute.xlu0 %854
      %v857 = vmul.f32 %v833, %v855
      %859 = vrot.lane.b32.xlu0 %v851, 96
      %v860 = vpop.permute.xlu0 %859
      %862 = vst.msk [vmem:[#allocation3] sm:$0x1] %vm116, %v860
      %864 = vrot.lane.b32.xlu0 %v857, 32
      %v865 = vpop.permute.xlu0 %864
      %867 = vst.msk [vmem:[#allocation2] sm:$0x1] %vm116, %v865
      %868 = vst.msk [vmem:[#allocation6 + $0x6] sm:$0x1] %vm116, %v865
    $region81: #{tpu_custom_call.1} parent=1 // pred_fallthru
      _
    %s869 = sld [smem:[#allocation8 + $0x7]]
    %p870 = scmp.eq.s32.totalorder %s869, 1
    %s871 = scalar_select %p870, 7, 8
    %p872 = scmp.lt.s32.totalorder %s780, %s871
    %s873 = scalar_select %p872, %s780, %s871
    %p874 = scmp.gt.s32.totalorder %s873, 7
    // Predicated region
    $region82: #{tpu_custom_call.1} parent=1 // pred_check
      %p875 = pneg %p874
    $region83: #{tpu_custom_call.1} parent=1 // pred_check_branch
      %877 = sbr.rel (%p875) target = $region85
    $region84: #{tpu_custom_call.1} parent=1 // pred_region
      %v878 = vld [vmem:[#allocation5 + $0x7] sm:$0x1]
      %v879 = vld [vmem:[#allocation2] sm:$0x1]
      %v880 = vld [vmem:[#allocation15] sm:$0xff]
      %v881 = vld [vmem:[#allocation15 + $0x8] sm:$0xff]
      %v882 = vld [vmem:[#allocation15 + $0x10] sm:$0xff]
      %v883 = vld [vmem:[#allocation15 + $0x18] sm:$0xff]
      %v885 = vsel %vm120, %v879, 0
      %887 = vmatpush.msra.mxu0 0.0
      %888 = vmatpush.msra.mxu0 0.0
      %889 = vmatpush.msra.mxu0 0.0
      %890 = vmatpush.msra.mxu0 0.0
      %891 = vmatpush.msra.mxu0 0.0
      %892 = vmatpush.msra.mxu0 0.0
      %893 = vmatpush.msra.mxu0 0.0
      %894 = vmatpush.msra.mxu0 0.0
      %895 = vmatpush.msra.mxu0 0.0
      %896 = vmatpush.msra.mxu0 0.0
      %897 = vmatpush.msra.mxu0 0.0
      %898 = vmatpush.msra.mxu0 0.0
      %899 = vmatpush.msra.mxu0 %v883
      %900 = vmatpush.msra.mxu0 %v882
      %901 = vmatpush.msra.mxu0 %v881
      %902 = vmatpush.msra.mxu0 %v880
      %903 = vmatmul.f32.gmra.mxu0 %v885
      %v904 = vpop.f32.mrf.mxu0
      %v905 = vadd.f32 0.0, %v904
      %906 = vdwg.mxu0
      %v907 = vadd.f32 %v878, %v905
      %v908 = vxor.u32 %v907, 2147483648
      %v909 = vmul.f32 %v908, 1.442695
      %v910 = vpow.pop %v909
      %v911 = vadd.f32 %v910, 1.0
      %v912 = vrcp.pop %v911
      %v913 = vmul.f32 %v911, %v912
      %v914 = vsub.f32 1.0, %v913
      %v915 = vmul.f32 %v912, %v914
      %v916 = vadd.f32 %v912, %v915
      %vm917 = vweird.f32 %v911
      %vm918 = vweird.f32 %v912
      %vm919 = vmor %vm917, %vm918
      %v920 = vsel %vm919, %v912, %v916
      %v921 = vand.u32 2147483647, %v911
      %vm922 = vcmp.eq.f32.partialorder %v921, 8.507059e+37
      %v923 = vand.u32 %v911, 2147483648
      %v924 = vor.u32 1.1754944e-38, %v923
      %v925 = vsel %vm922, %v924, %v920
      %v926 = vmul.f32 1.0, %v925
      %v927 = vtanh.pop %v907
      %v928 = vld [vmem:[#allocation3] sm:$0x1]
      %v930 = vperm.slane %v928, 0
      %931 = vrot.lane.b32.xlu0 %v930, 32
      %v932 = vpop.permute.xlu0 %931
      %v934 = vmul.f32 %v926, %v932
      %936 = vrot.lane.b32.xlu0 %v927, 64
      %v937 = vpop.permute.xlu0 %936
      %v939 = vmul.f32 %v926, %v937
      %941 = vrot.lane.b32.xlu0 %v939, 32
      %v942 = vpop.permute.xlu0 %941
      %v944 = vadd.f32 %v934, %v942
      %v945 = vtanh.pop %v944
      %947 = vrot.lane.b32.xlu0 %v945, 64
      %v948 = vpop.permute.xlu0 %947
      %v950 = vmul.f32 %v926, %v948
      %952 = vrot.lane.b32.xlu0 %v944, 96
      %v953 = vpop.permute.xlu0 %952
      %955 = vst.msk [vmem:[#allocation3] sm:$0x1] %vm116, %v953
      %957 = vrot.lane.b32.xlu0 %v950, 32
      %v958 = vpop.permute.xlu0 %957
      %960 = vst.msk [vmem:[#allocation2] sm:$0x1] %vm116, %v958
      %961 = vst.msk [vmem:[#allocation6 + $0x7] sm:$0x1] %vm116, %v958
    $region85: #{tpu_custom_call.1} parent=1 // pred_fallthru
      _
    %v962 = vld [vmem:[#allocation6] sm:$0xff]
    %v963 = vld [vmem:[#allocation17] sm:$0xff]
    %v964 = vld [vmem:[#allocation17 + $0x8] sm:$0xff]
    %v965 = vld [vmem:[#allocation17 + $0x10] sm:$0xff]
    %v966 = vld [vmem:[#allocation17 + $0x18] sm:$0xff]
    %v967 = vld [vmem:[%s7] sm:$0x1]
    %v969 = vperm.slane %v967, 0
    %v972 = vsel %vm120, %v962, 0
    %974 = vmatpush.msra.mxu0 0.0
    %975 = vmatpush.msra.mxu0 0.0
    %976 = vmatpush.msra.mxu0 0.0
    %977 = vmatpush.msra.mxu0 0.0
    %978 = vmatpush.msra.mxu0 0.0
    %979 = vmatpush.msra.mxu0 0.0
    %980 = vmatpush.msra.mxu0 0.0
    %981 = vmatpush.msra.mxu0 0.0
    %982 = vmatpush.msra.mxu0 0.0
    %983 = vmatpush.msra.mxu0 0.0
    %984 = vmatpush.msra.mxu0 0.0
    %985 = vmatpush.msra.mxu0 0.0
    %986 = vmatpush.msra.mxu0 %v966
    %987 = vmatpush.msra.mxu0 %v965
    %988 = vmatpush.msra.mxu0 %v964
    %989 = vmatpush.msra.mxu0 %v963
    %990 = vmatmul.f32.gmra.mxu0 %v972
    %v991 = vpop.f32.mrf.mxu0
    %v992 = vadd.f32 %v969, %v991
    %993 = vdwg.mxu0
    %v994 = vmax.f32 %v992, 0.0
    %v995 = vlaneseq
    %v996 = vshrl.u32 %v995, 7
    %v997 = vstv %s873
    %vm998 = vcmp.ge.s32.totalorder %v996, %v997
    %v999 = vld [vmem:[%s8] sm:$0x1]
    %v1001 = vperm.slane %v999, 0
    %v1003 = vsel %vm998, %v1001, %v994
    %1004 = vst [vmem:[#allocation18] sm:$0xff] %v1003
    // Predicated region
    $region86: #{tpu_custom_call.1} parent=1 // pred_check
      _
    $region87: #{tpu_custom_call.1} parent=1 // pred_check_branch
      %1006 = sbr.rel (0) target = $region89
    $region88: #{tpu_custom_call.1} parent=1 // pred_region
      %1008 = vsyncadd [#allocation11], 0
      %s1010 = sshll.u32 [#allocation18], 4
      %s1011 = int_to_ptr.vmem [resolvable:$true] %s1010
      %s1012 = sshll.u32 %s9, 4
      %s1013 = int_to_ptr.hbm [resolvable:$true] %s1012
      %1015 = dma.vmem_to_hbm [thread:$0]  %s1011, 128, %s1013, [#allocation11]
    $region89: #{tpu_custom_call.1} parent=1 // pred_fallthru
      _
    // Predicated region
    $region90: #{tpu_custom_call.1} parent=1 // pred_check
      _
    $region91: #{tpu_custom_call.1} parent=1 // pred_check_branch
      %1017 = sbr.rel (0) target = $region93
    $region92: #{tpu_custom_call.1} parent=1 // pred_region
      %1019 = dma.done [#allocation11], 128
    $region93: #{tpu_custom_call.1} parent=1 // pred_fallthru
      _
    %1020 = vsyncpa [#allocation10], 1
    %1021 = vsyncpa [#allocation13], 1
    %1022 = vsyncpa [#allocation16], 1
    %1023 = vsyncpa [#allocation11], 1

</llo_original>
